<compile_context>
chip_gen: v7x
topology: tpu7x:2x2x1
jax: 0.10.0
libtpu: 0.0.40
codegen_flags: <defaults>
</compile_context>

<pallas_src>
import functools

import jax
import jax.numpy as jnp
import numpy as np
from jax.experimental import pallas as pl
from jax.experimental.pallas import tpu as pltpu


def _conv_bias_res_relu_kernel(x_ref, w_ref, add_ref, o_ref, acc_ref, *,
                               OH, OW, KW, Cin):
    """One (image n, kernel-row kh) grid step of the implicit-GEMM conv.

    x_ref  : (H, W, Cin)        full NHWC image n (resident across kh)
    w_ref  : (KW, Cin, COUTP)   weights for the current kernel row kh
    add_ref: (P, COUTP)         bias + residual (P = OH*OW), lane-padded
    o_ref  : (P, COUTP)         output, lane-padded
    acc_ref: (P, COUTP) f32     VMEM accumulator scratch
    """
    kh = pl.program_id(1)

    @pl.when(kh == 0)
    def _init():
        acc_ref[...] = jnp.zeros_like(acc_ref)

    # Input rows that interact with kernel row `kh`.
    x_rows = x_ref[pl.ds(kh, OH), :, :]                       # (OH, W, Cin)

    acc = acc_ref[...]
    for kw in range(KW):                                      # static unroll
        xs = x_rows[:, kw:kw + OW, :].reshape(OH * OW, Cin)   # (P, Cin)
        acc = acc + jnp.dot(xs, w_ref[kw],                    # (Cin, COUTP)
                            preferred_element_type=jnp.float32)
    acc_ref[...] = acc

    @pl.when(kh == pl.num_programs(1) - 1)
    def _finalize():
        o_ref[...] = jnp.maximum(acc_ref[...] + add_ref[...], 0.0)


def model_forward(x1, x3, weight, bias):
    """relu(conv2d(x1, weight, bias, stride=1, padding=0) + x3).

    x1    : (N, Cin, H, W)      float32 (NCHW)
    x3    : (N, Cout, OH, OW)   float32
    weight: (Cout, Cin, KH, KW) float32
    bias  : (Cout,)             float32
    returns (N, Cout, OH, OW)   float32
    """
    N, Cin, H, W = x1.shape
    Cout, _, KH, KW = weight.shape
    OH, OW = H - KH + 1, W - KW + 1
    P = OH * OW
    COUTP = ((Cout + 127) // 128) * 128        # lane-dense output channels

    # --- minimal wrapper glue (no im2col) ---
    x_nhwc = jnp.transpose(x1, (0, 2, 3, 1))                  # (N, H, W, Cin)

    # weight (Cout, Cin, KH, KW) -> (KH, KW, Cin, Cout) -> pad Cout to COUTP
    w = jnp.transpose(weight, (2, 3, 1, 0))
    w = jnp.pad(w, ((0, 0), (0, 0), (0, 0), (0, COUTP - Cout)))

    # bias folded into the residual, flattened spatial, lane-padded
    add = jnp.transpose(x3, (0, 2, 3, 1)) + bias.reshape(1, 1, 1, Cout)
    add = add.reshape(N, P, Cout)
    add = jnp.pad(add, ((0, 0), (0, 0), (0, COUTP - Cout)))   # (N, P, COUTP)

    flops = 2 * N * P * KH * KW * Cin * Cout
    bytes_accessed = 4 * (N * H * W * Cin
                          + KH * KW * Cin * COUTP
                          + 2 * N * P * COUTP)

    kernel = functools.partial(_conv_bias_res_relu_kernel,
                               OH=OH, OW=OW, KW=KW, Cin=Cin)

    out = pl.pallas_call(
        kernel,
        out_shape=jax.ShapeDtypeStruct((N, P, COUTP), jnp.float32),
        grid_spec=pltpu.PrefetchScalarGridSpec(
            num_scalar_prefetch=0,
            grid=(N, KH),                      # kh = reduction axis (last)
            in_specs=[
                pl.BlockSpec((None, H, W, Cin),
                             lambda n, kh: (n, 0, 0, 0)),
                pl.BlockSpec((None, KW, Cin, COUTP),
                             lambda n, kh: (kh, 0, 0, 0)),
                pl.BlockSpec((None, P, COUTP),
                             lambda n, kh: (n, 0, 0)),
            ],
            out_specs=pl.BlockSpec((None, P, COUTP),
                                   lambda n, kh: (n, 0, 0)),
            scratch_shapes=[pltpu.VMEM((P, COUTP), jnp.float32)],
        ),
        compiler_params=pltpu.CompilerParams(
            dimension_semantics=("parallel", "arbitrary")),
        cost_estimate=pl.CostEstimate(flops=int(flops),
                                      transcendentals=0,
                                      bytes_accessed=int(bytes_accessed)),
    )(x_nhwc, w, add)

    out = out[:, :, :Cout].reshape(N, OH, OW, Cout)
    return jnp.transpose(out, (0, 3, 1, 2))


if __name__ == "__main__":
    # Shapes consistent with the module: Conv2d(16, 16, kernel=15, pad=0);
    # spatial >= 15, pick 16x16 -> output 2x2.  N=2 exercises the parallel axis.
    N, Cin, H, W = 2, 16, 16, 16
    Cout, KH, KW = 16, 15, 15
    OH, OW = H - KH + 1, W - KW + 1

    key = jax.random.PRNGKey(0)
    k1, k2, k3, k4 = jax.random.split(key, 4)
    x1 = jax.random.normal(k1, (N, Cin, H, W), dtype=jnp.float32)
    x3 = jax.random.normal(k2, (N, Cout, OH, OW), dtype=jnp.float32)
    fan_in = Cin * KH * KW
    bound = 1.0 / np.sqrt(fan_in)
    weight = jax.random.uniform(k3, (Cout, Cin, KH, KW), dtype=jnp.float32,
                                minval=-bound, maxval=bound)
    bias = jax.random.uniform(k4, (Cout,), dtype=jnp.float32,
                              minval=-bound, maxval=bound)

    fwd = jax.jit(model_forward)
    out = jax.block_until_ready(fwd(x1, x3, weight, bias))

    # Reference check with XLA's conv
    ref_conv = jax.lax.conv_general_dilated(
        x1, weight, window_strides=(1, 1), padding="VALID",
        dimension_numbers=("NCHW", "OIHW", "NCHW"))
    ref = jnp.maximum(ref_conv + bias.reshape(1, Cout, 1, 1) + x3, 0.0)
    assert out.shape == (N, Cout, OH, OW)
    np.testing.assert_allclose(np.asarray(out), np.asarray(ref),
                               rtol=1e-4, atol=1e-4)
    print("KERNEL_OK")
</pallas_src>

<mosaic_0001>
module attributes {stable_mosaic.version = 11 : i64} {
  func.func @_conv_bias_res_relu_kernel(%arg0: i32, %arg1: i32, %arg2: memref<1x16x16x16xf32, #tpu.memory_space<vmem>>, %arg3: memref<1x15x16x128xf32, #tpu.memory_space<vmem>>, %arg4: memref<1x4x128xf32, #tpu.memory_space<vmem>>, %arg5: memref<1x4x128xf32, #tpu.memory_space<vmem>>, %arg6: memref<4x128xf32, #tpu.memory_space<vmem>>) attributes {dimension_semantics = [#tpu.dimension_semantics<parallel>, #tpu.dimension_semantics<arbitrary>], iteration_bounds = array<i64: 2, 15>, scalar_prefetch = 0 : i64, scratch_operands = 1 : i64, tpu.core_type = #tpu.core_type<tc>, window_params = [{transform_indices = @transform_0, window_bounds = array<i64: 1, 16, 16, 16>}, {transform_indices = @transform_1, window_bounds = array<i64: 1, 15, 16, 128>}, {transform_indices = @transform_2, window_bounds = array<i64: 1, 4, 128>}, {transform_indices = @transform_3, window_bounds = array<i64: 1, 4, 128>}]} {
    %c0_i32 = arith.constant 0 : i32
    %0 = arith.cmpi eq, %arg1, %c0_i32 : i32
    %1 = arith.extui %0 : i1 to i32
    %c0_i32_0 = arith.constant 0 : i32
    %2 = arith.cmpi ne, %1, %c0_i32_0 : i32
    scf.if %2 {
      %cst_68 = arith.constant 0.000000e+00 : f32
      %101 = vector.broadcast %cst_68 : f32 to vector<4x128xf32>
      %c0_69 = arith.constant 0 : index
      %c0_70 = arith.constant 0 : index
      %102 = vector.load %arg6[%c0_69, %c0_70] : memref<4x128xf32, #tpu.memory_space<vmem>>, vector<4x128xf32>
      tpu.vector_store %arg6[%c0_69, %c0_70], %101 {strides = array<i32>} : memref<4x128xf32, #tpu.memory_space<vmem>>, vector<4x128xf32>,
    } else {
    }
    %c0 = arith.constant 0 : index
    %3 = arith.index_cast %arg1 : i32 to index
    %c0_1 = arith.constant 0 : index
    %c0_2 = arith.constant 0 : index
    %4 = vector.load %arg2[%c0, %3, %c0_1, %c0_2] : memref<1x16x16x16xf32, #tpu.memory_space<vmem>>, vector<1x2x16x16xf32>
    %5 = vector.shape_cast %4 : vector<1x2x16x16xf32> to vector<2x16x16xf32>
    %c0_3 = arith.constant 0 : index
    %c0_4 = arith.constant 0 : index
    %6 = vector.load %arg6[%c0_3, %c0_4] : memref<4x128xf32, #tpu.memory_space<vmem>>, vector<4x128xf32>
    %7 = vector.extract_strided_slice %5 {offsets = [0, 0, 0], sizes = [2, 2, 16], strides = [1, 1, 1]} : vector<2x16x16xf32> to vector<2x2x16xf32>
    %8 = vector.shape_cast %7 : vector<2x2x16xf32> to vector<4x16xf32>
    %c0_5 = arith.constant 0 : index
    %c0_6 = arith.constant 0 : index
    %c0_7 = arith.constant 0 : index
    %c0_8 = arith.constant 0 : index
    %9 = vector.load %arg3[%c0_5, %c0_6, %c0_7, %c0_8] : memref<1x15x16x128xf32, #tpu.memory_space<vmem>>, vector<1x1x16x128xf32>
    %10 = vector.shape_cast %9 : vector<1x1x16x128xf32> to vector<16x128xf32>
    %cst = arith.constant dense<0.000000e+00> : vector<4x128xf32>
    %11 = tpu.matmul %8, %10, %cst {dimension_numbers = #tpu.dot_dimension_numbers<[1], [0], [0], [1], [0, 0, 1, 1], [], []>} : vector<4x16xf32>, vector<16x128xf32>, vector<4x128xf32> -> vector<4x128xf32>
    %12 = arith.addf %6, %11 : vector<4x128xf32>
    %13 = vector.extract_strided_slice %5 {offsets = [0, 1, 0], sizes = [2, 2, 16], strides = [1, 1, 1]} : vector<2x16x16xf32> to vector<2x2x16xf32>
    %14 = vector.shape_cast %13 : vector<2x2x16xf32> to vector<4x16xf32>
    %c0_9 = arith.constant 0 : index
    %c1 = arith.constant 1 : index
    %c0_10 = arith.constant 0 : index
    %c0_11 = arith.constant 0 : index
    %15 = vector.load %arg3[%c0_9, %c1, %c0_10, %c0_11] : memref<1x15x16x128xf32, #tpu.memory_space<vmem>>, vector<1x1x16x128xf32>
    %16 = vector.shape_cast %15 : vector<1x1x16x128xf32> to vector<16x128xf32>
    %cst_12 = arith.constant dense<0.000000e+00> : vector<4x128xf32>
    %17 = tpu.matmul %14, %16, %cst_12 {dimension_numbers = #tpu.dot_dimension_numbers<[1], [0], [0], [1], [0, 0, 1, 1], [], []>} : vector<4x16xf32>, vector<16x128xf32>, vector<4x128xf32> -> vector<4x128xf32>
    %18 = arith.addf %12, %17 : vector<4x128xf32>
    %19 = vector.extract_strided_slice %5 {offsets = [0, 2, 0], sizes = [2, 2, 16], strides = [1, 1, 1]} : vector<2x16x16xf32> to vector<2x2x16xf32>
    %20 = vector.shape_cast %19 : vector<2x2x16xf32> to vector<4x16xf32>
    %c0_13 = arith.constant 0 : index
    %c2 = arith.constant 2 : index
    %c0_14 = arith.constant 0 : index
    %c0_15 = arith.constant 0 : index
    %21 = vector.load %arg3[%c0_13, %c2, %c0_14, %c0_15] : memref<1x15x16x128xf32, #tpu.memory_space<vmem>>, vector<1x1x16x128xf32>
    %22 = vector.shape_cast %21 : vector<1x1x16x128xf32> to vector<16x128xf32>
    %cst_16 = arith.constant dense<0.000000e+00> : vector<4x128xf32>
    %23 = tpu.matmul %20, %22, %cst_16 {dimension_numbers = #tpu.dot_dimension_numbers<[1], [0], [0], [1], [0, 0, 1, 1], [], []>} : vector<4x16xf32>, vector<16x128xf32>, vector<4x128xf32> -> vector<4x128xf32>
    %24 = arith.addf %18, %23 : vector<4x128xf32>
    %25 = vector.extract_strided_slice %5 {offsets = [0, 3, 0], sizes = [2, 2, 16], strides = [1, 1, 1]} : vector<2x16x16xf32> to vector<2x2x16xf32>
    %26 = vector.shape_cast %25 : vector<2x2x16xf32> to vector<4x16xf32>
    %c0_17 = arith.constant 0 : index
    %c3 = arith.constant 3 : index
    %c0_18 = arith.constant 0 : index
    %c0_19 = arith.constant 0 : index
    %27 = vector.load %arg3[%c0_17, %c3, %c0_18, %c0_19] : memref<1x15x16x128xf32, #tpu.memory_space<vmem>>, vector<1x1x16x128xf32>
    %28 = vector.shape_cast %27 : vector<1x1x16x128xf32> to vector<16x128xf32>
    %cst_20 = arith.constant dense<0.000000e+00> : vector<4x128xf32>
    %29 = tpu.matmul %26, %28, %cst_20 {dimension_numbers = #tpu.dot_dimension_numbers<[1], [0], [0], [1], [0, 0, 1, 1], [], []>} : vector<4x16xf32>, vector<16x128xf32>, vector<4x128xf32> -> vector<4x128xf32>
    %30 = arith.addf %24, %29 : vector<4x128xf32>
    %31 = vector.extract_strided_slice %5 {offsets = [0, 4, 0], sizes = [2, 2, 16], strides = [1, 1, 1]} : vector<2x16x16xf32> to vector<2x2x16xf32>
    %32 = vector.shape_cast %31 : vector<2x2x16xf32> to vector<4x16xf32>
    %c0_21 = arith.constant 0 : index
    %c4 = arith.constant 4 : index
    %c0_22 = arith.constant 0 : index
    %c0_23 = arith.constant 0 : index
    %33 = vector.load %arg3[%c0_21, %c4, %c0_22, %c0_23] : memref<1x15x16x128xf32, #tpu.memory_space<vmem>>, vector<1x1x16x128xf32>
    %34 = vector.shape_cast %33 : vector<1x1x16x128xf32> to vector<16x128xf32>
    %cst_24 = arith.constant dense<0.000000e+00> : vector<4x128xf32>
    %35 = tpu.matmul %32, %34, %cst_24 {dimension_numbers = #tpu.dot_dimension_numbers<[1], [0], [0], [1], [0, 0, 1, 1], [], []>} : vector<4x16xf32>, vector<16x128xf32>, vector<4x128xf32> -> vector<4x128xf32>
    %36 = arith.addf %30, %35 : vector<4x128xf32>
    %37 = vector.extract_strided_slice %5 {offsets = [0, 5, 0], sizes = [2, 2, 16], strides = [1, 1, 1]} : vector<2x16x16xf32> to vector<2x2x16xf32>
    %38 = vector.shape_cast %37 : vector<2x2x16xf32> to vector<4x16xf32>
    %c0_25 = arith.constant 0 : index
    %c5 = arith.constant 5 : index
    %c0_26 = arith.constant 0 : index
    %c0_27 = arith.constant 0 : index
    %39 = vector.load %arg3[%c0_25, %c5, %c0_26, %c0_27] : memref<1x15x16x128xf32, #tpu.memory_space<vmem>>, vector<1x1x16x128xf32>
    %40 = vector.shape_cast %39 : vector<1x1x16x128xf32> to vector<16x128xf32>
    %cst_28 = arith.constant dense<0.000000e+00> : vector<4x128xf32>
    %41 = tpu.matmul %38, %40, %cst_28 {dimension_numbers = #tpu.dot_dimension_numbers<[1], [0], [0], [1], [0, 0, 1, 1], [], []>} : vector<4x16xf32>, vector<16x128xf32>, vector<4x128xf32> -> vector<4x128xf32>
    %42 = arith.addf %36, %41 : vector<4x128xf32>
    %43 = vector.extract_strided_slice %5 {offsets = [0, 6, 0], sizes = [2, 2, 16], strides = [1, 1, 1]} : vector<2x16x16xf32> to vector<2x2x16xf32>
    %44 = vector.shape_cast %43 : vector<2x2x16xf32> to vector<4x16xf32>
    %c0_29 = arith.constant 0 : index
    %c6 = arith.constant 6 : index
    %c0_30 = arith.constant 0 : index
    %c0_31 = arith.constant 0 : index
    %45 = vector.load %arg3[%c0_29, %c6, %c0_30, %c0_31] : memref<1x15x16x128xf32, #tpu.memory_space<vmem>>, vector<1x1x16x128xf32>
    %46 = vector.shape_cast %45 : vector<1x1x16x128xf32> to vector<16x128xf32>
    %cst_32 = arith.constant dense<0.000000e+00> : vector<4x128xf32>
    %47 = tpu.matmul %44, %46, %cst_32 {dimension_numbers = #tpu.dot_dimension_numbers<[1], [0], [0], [1], [0, 0, 1, 1], [], []>} : vector<4x16xf32>, vector<16x128xf32>, vector<4x128xf32> -> vector<4x128xf32>
    %48 = arith.addf %42, %47 : vector<4x128xf32>
    %49 = vector.extract_strided_slice %5 {offsets = [0, 7, 0], sizes = [2, 2, 16], strides = [1, 1, 1]} : vector<2x16x16xf32> to vector<2x2x16xf32>
    %50 = vector.shape_cast %49 : vector<2x2x16xf32> to vector<4x16xf32>
    %c0_33 = arith.constant 0 : index
    %c7 = arith.constant 7 : index
    %c0_34 = arith.constant 0 : index
    %c0_35 = arith.constant 0 : index
    %51 = vector.load %arg3[%c0_33, %c7, %c0_34, %c0_35] : memref<1x15x16x128xf32, #tpu.memory_space<vmem>>, vector<1x1x16x128xf32>
    %52 = vector.shape_cast %51 : vector<1x1x16x128xf32> to vector<16x128xf32>
    %cst_36 = arith.constant dense<0.000000e+00> : vector<4x128xf32>
    %53 = tpu.matmul %50, %52, %cst_36 {dimension_numbers = #tpu.dot_dimension_numbers<[1], [0], [0], [1], [0, 0, 1, 1], [], []>} : vector<4x16xf32>, vector<16x128xf32>, vector<4x128xf32> -> vector<4x128xf32>
    %54 = arith.addf %48, %53 : vector<4x128xf32>
    %55 = vector.extract_strided_slice %5 {offsets = [0, 8, 0], sizes = [2, 2, 16], strides = [1, 1, 1]} : vector<2x16x16xf32> to vector<2x2x16xf32>
    %56 = vector.shape_cast %55 : vector<2x2x16xf32> to vector<4x16xf32>
    %c0_37 = arith.constant 0 : index
    %c8 = arith.constant 8 : index
    %c0_38 = arith.constant 0 : index
    %c0_39 = arith.constant 0 : index
    %57 = vector.load %arg3[%c0_37, %c8, %c0_38, %c0_39] : memref<1x15x16x128xf32, #tpu.memory_space<vmem>>, vector<1x1x16x128xf32>
    %58 = vector.shape_cast %57 : vector<1x1x16x128xf32> to vector<16x128xf32>
    %cst_40 = arith.constant dense<0.000000e+00> : vector<4x128xf32>
    %59 = tpu.matmul %56, %58, %cst_40 {dimension_numbers = #tpu.dot_dimension_numbers<[1], [0], [0], [1], [0, 0, 1, 1], [], []>} : vector<4x16xf32>, vector<16x128xf32>, vector<4x128xf32> -> vector<4x128xf32>
    %60 = arith.addf %54, %59 : vector<4x128xf32>
    %61 = vector.extract_strided_slice %5 {offsets = [0, 9, 0], sizes = [2, 2, 16], strides = [1, 1, 1]} : vector<2x16x16xf32> to vector<2x2x16xf32>
    %62 = vector.shape_cast %61 : vector<2x2x16xf32> to vector<4x16xf32>
    %c0_41 = arith.constant 0 : index
    %c9 = arith.constant 9 : index
    %c0_42 = arith.constant 0 : index
    %c0_43 = arith.constant 0 : index
    %63 = vector.load %arg3[%c0_41, %c9, %c0_42, %c0_43] : memref<1x15x16x128xf32, #tpu.memory_space<vmem>>, vector<1x1x16x128xf32>
    %64 = vector.shape_cast %63 : vector<1x1x16x128xf32> to vector<16x128xf32>
    %cst_44 = arith.constant dense<0.000000e+00> : vector<4x128xf32>
    %65 = tpu.matmul %62, %64, %cst_44 {dimension_numbers = #tpu.dot_dimension_numbers<[1], [0], [0], [1], [0, 0, 1, 1], [], []>} : vector<4x16xf32>, vector<16x128xf32>, vector<4x128xf32> -> vector<4x128xf32>
    %66 = arith.addf %60, %65 : vector<4x128xf32>
    %67 = vector.extract_strided_slice %5 {offsets = [0, 10, 0], sizes = [2, 2, 16], strides = [1, 1, 1]} : vector<2x16x16xf32> to vector<2x2x16xf32>
    %68 = vector.shape_cast %67 : vector<2x2x16xf32> to vector<4x16xf32>
    %c0_45 = arith.constant 0 : index
    %c10 = arith.constant 10 : index
    %c0_46 = arith.constant 0 : index
    %c0_47 = arith.constant 0 : index
    %69 = vector.load %arg3[%c0_45, %c10, %c0_46, %c0_47] : memref<1x15x16x128xf32, #tpu.memory_space<vmem>>, vector<1x1x16x128xf32>
    %70 = vector.shape_cast %69 : vector<1x1x16x128xf32> to vector<16x128xf32>
    %cst_48 = arith.constant dense<0.000000e+00> : vector<4x128xf32>
    %71 = tpu.matmul %68, %70, %cst_48 {dimension_numbers = #tpu.dot_dimension_numbers<[1], [0], [0], [1], [0, 0, 1, 1], [], []>} : vector<4x16xf32>, vector<16x128xf32>, vector<4x128xf32> -> vector<4x128xf32>
    %72 = arith.addf %66, %71 : vector<4x128xf32>
    %73 = vector.extract_strided_slice %5 {offsets = [0, 11, 0], sizes = [2, 2, 16], strides = [1, 1, 1]} : vector<2x16x16xf32> to vector<2x2x16xf32>
    %74 = vector.shape_cast %73 : vector<2x2x16xf32> to vector<4x16xf32>
    %c0_49 = arith.constant 0 : index
    %c11 = arith.constant 11 : index
    %c0_50 = arith.constant 0 : index
    %c0_51 = arith.constant 0 : index
    %75 = vector.load %arg3[%c0_49, %c11, %c0_50, %c0_51] : memref<1x15x16x128xf32, #tpu.memory_space<vmem>>, vector<1x1x16x128xf32>
    %76 = vector.shape_cast %75 : vector<1x1x16x128xf32> to vector<16x128xf32>
    %cst_52 = arith.constant dense<0.000000e+00> : vector<4x128xf32>
    %77 = tpu.matmul %74, %76, %cst_52 {dimension_numbers = #tpu.dot_dimension_numbers<[1], [0], [0], [1], [0, 0, 1, 1], [], []>} : vector<4x16xf32>, vector<16x128xf32>, vector<4x128xf32> -> vector<4x128xf32>
    %78 = arith.addf %72, %77 : vector<4x128xf32>
    %79 = vector.extract_strided_slice %5 {offsets = [0, 12, 0], sizes = [2, 2, 16], strides = [1, 1, 1]} : vector<2x16x16xf32> to vector<2x2x16xf32>
    %80 = vector.shape_cast %79 : vector<2x2x16xf32> to vector<4x16xf32>
    %c0_53 = arith.constant 0 : index
    %c12 = arith.constant 12 : index
    %c0_54 = arith.constant 0 : index
    %c0_55 = arith.constant 0 : index
    %81 = vector.load %arg3[%c0_53, %c12, %c0_54, %c0_55] : memref<1x15x16x128xf32, #tpu.memory_space<vmem>>, vector<1x1x16x128xf32>
    %82 = vector.shape_cast %81 : vector<1x1x16x128xf32> to vector<16x128xf32>
    %cst_56 = arith.constant dense<0.000000e+00> : vector<4x128xf32>
    %83 = tpu.matmul %80, %82, %cst_56 {dimension_numbers = #tpu.dot_dimension_numbers<[1], [0], [0], [1], [0, 0, 1, 1], [], []>} : vector<4x16xf32>, vector<16x128xf32>, vector<4x128xf32> -> vector<4x128xf32>
    %84 = arith.addf %78, %83 : vector<4x128xf32>
    %85 = vector.extract_strided_slice %5 {offsets = [0, 13, 0], sizes = [2, 2, 16], strides = [1, 1, 1]} : vector<2x16x16xf32> to vector<2x2x16xf32>
    %86 = vector.shape_cast %85 : vector<2x2x16xf32> to vector<4x16xf32>
    %c0_57 = arith.constant 0 : index
    %c13 = arith.constant 13 : index
    %c0_58 = arith.constant 0 : index
    %c0_59 = arith.constant 0 : index
    %87 = vector.load %arg3[%c0_57, %c13, %c0_58, %c0_59] : memref<1x15x16x128xf32, #tpu.memory_space<vmem>>, vector<1x1x16x128xf32>
    %88 = vector.shape_cast %87 : vector<1x1x16x128xf32> to vector<16x128xf32>
    %cst_60 = arith.constant dense<0.000000e+00> : vector<4x128xf32>
    %89 = tpu.matmul %86, %88, %cst_60 {dimension_numbers = #tpu.dot_dimension_numbers<[1], [0], [0], [1], [0, 0, 1, 1], [], []>} : vector<4x16xf32>, vector<16x128xf32>, vector<4x128xf32> -> vector<4x128xf32>
    %90 = arith.addf %84, %89 : vector<4x128xf32>
    %91 = vector.extract_strided_slice %5 {offsets = [0, 14, 0], sizes = [2, 2, 16], strides = [1, 1, 1]} : vector<2x16x16xf32> to vector<2x2x16xf32>
    %92 = vector.shape_cast %91 : vector<2x2x16xf32> to vector<4x16xf32>
    %c0_61 = arith.constant 0 : index
    %c14 = arith.constant 14 : index
    %c0_62 = arith.constant 0 : index
    %c0_63 = arith.constant 0 : index
    %93 = vector.load %arg3[%c0_61, %c14, %c0_62, %c0_63] : memref<1x15x16x128xf32, #tpu.memory_space<vmem>>, vector<1x1x16x128xf32>
    %94 = vector.shape_cast %93 : vector<1x1x16x128xf32> to vector<16x128xf32>
    %cst_64 = arith.constant dense<0.000000e+00> : vector<4x128xf32>
    %95 = tpu.matmul %92, %94, %cst_64 {dimension_numbers = #tpu.dot_dimension_numbers<[1], [0], [0], [1], [0, 0, 1, 1], [], []>} : vector<4x16xf32>, vector<16x128xf32>, vector<4x128xf32> -> vector<4x128xf32>
    %96 = arith.addf %90, %95 : vector<4x128xf32>
    %c0_65 = arith.constant 0 : index
    %c0_66 = arith.constant 0 : index
    %97 = vector.load %arg6[%c0_65, %c0_66] : memref<4x128xf32, #tpu.memory_space<vmem>>, vector<4x128xf32>
    tpu.vector_store %arg6[%c0_65, %c0_66], %96 {strides = array<i32>} : memref<4x128xf32, #tpu.memory_space<vmem>>, vector<4x128xf32>,
    %c14_i32 = arith.constant 14 : i32
    %98 = arith.cmpi eq, %arg1, %c14_i32 : i32
    %99 = arith.extui %98 : i1 to i32
    %c0_i32_67 = arith.constant 0 : i32
    %100 = arith.cmpi ne, %99, %c0_i32_67 : i32
    scf.if %100 {
      %c0_68 = arith.constant 0 : index
      %c0_69 = arith.constant 0 : index
      %101 = vector.load %arg6[%c0_68, %c0_69] : memref<4x128xf32, #tpu.memory_space<vmem>>, vector<4x128xf32>
      %c0_70 = arith.constant 0 : index
      %c0_71 = arith.constant 0 : index
      %c0_72 = arith.constant 0 : index
      %102 = vector.load %arg4[%c0_70, %c0_71, %c0_72] : memref<1x4x128xf32, #tpu.memory_space<vmem>>, vector<1x4x128xf32>
      %103 = vector.shape_cast %102 : vector<1x4x128xf32> to vector<4x128xf32>
      %104 = arith.addf %101, %103 : vector<4x128xf32>
      %cst_73 = arith.constant 0.000000e+00 : f32
      %105 = vector.broadcast %cst_73 : f32 to vector<4x128xf32>
      %106 = arith.maximumf %104, %105 : vector<4x128xf32>
      %c0_74 = arith.constant 0 : index
      %c0_75 = arith.constant 0 : index
      %c0_76 = arith.constant 0 : index
      %107 = vector.load %arg5[%c0_74, %c0_75, %c0_76] : memref<1x4x128xf32, #tpu.memory_space<vmem>>, vector<1x4x128xf32>
      %108 = vector.shape_cast %107 : vector<1x4x128xf32> to vector<4x128xf32>
      %109 = vector.shape_cast %106 : vector<4x128xf32> to vector<1x4x128xf32>
      tpu.vector_store %arg5[%c0_74, %c0_75, %c0_76], %109 {strides = array<i32>} : memref<1x4x128xf32, #tpu.memory_space<vmem>>, vector<1x4x128xf32>,
    } else {
    }
    return
  }
  func.func @transform_0(%arg0: i32, %arg1: i32) -> (i32, i32, i32, i32) {
    %c0_i32 = arith.constant 0 : i32
    %c0_i32_0 = arith.constant 0 : i32
    %c0_i32_1 = arith.constant 0 : i32
    %c0_i32_2 = arith.constant 0 : i32
    return %arg0, %c0_i32, %c0_i32_0, %c0_i32_1 : i32, i32, i32, i32
  }
  func.func @transform_1(%arg0: i32, %arg1: i32) -> (i32, i32, i32, i32) {
    %c0_i32 = arith.constant 0 : i32
    %c0_i32_0 = arith.constant 0 : i32
    %c0_i32_1 = arith.constant 0 : i32
    %c0_i32_2 = arith.constant 0 : i32
    return %arg1, %c0_i32, %c0_i32_0, %c0_i32_1 : i32, i32, i32, i32
  }
  func.func @transform_2(%arg0: i32, %arg1: i32) -> (i32, i32, i32) {
    %c0_i32 = arith.constant 0 : i32
    %c0_i32_0 = arith.constant 0 : i32
    %c0_i32_1 = arith.constant 0 : i32
    return %arg0, %c0_i32, %c0_i32_0 : i32, i32, i32
  }
  func.func @transform_3(%arg0: i32, %arg1: i32) -> (i32, i32, i32) {
    %c0_i32 = arith.constant 0 : i32
    %c0_i32_0 = arith.constant 0 : i32
    %c0_i32_1 = arith.constant 0 : i32
    return %arg0, %c0_i32, %c0_i32_0 : i32, i32, i32
  }
}

</mosaic_0001>

<llo_original>
// kernel: model_forward.1
$region0: #{model_forward.1}
  #allocation0 [shape = 'u32[]', space=smem, size = 0x4, offset = 0x4, fixed_abs, tag = 'smem constant byte address 0x4 - core index']
  #allocation1 [shape = 'u32[144,128]{1,0:T(1,128)}', space=vmem, size = 0x12000, scoped, tag = 'internal scratch']
  #allocation2 [shape = 'f32[4,128]{1,0:T(4,128)}', space=vmem, size = 0x800, scoped, tag = 'scratch operand']
  %s0 = inlined_call_operand.vmem [shape: f32[2,16,16,16], index: 0, kind: input, shape index: {}]
  %s1 = inlined_call_operand.vmem [shape: f32[15,15,16,128], index: 1, kind: input, shape index: {}]
  %s2 = inlined_call_operand.vmem [shape: f32[2,4,128], index: 2, kind: input, shape index: {}]
  %s3 = inlined_call_operand.hbm [shape: f32[2,4,128], index: 3, kind: output, shape index: {}]
  %s4 = sld [smem:[#allocation0]]
  $region53: #{model_forward.1} parent=0
    _
  %s6 = ssub.s32 1, %s4
  %s7 = scalar_select 0, %s6, %s4
  $region1: #{model_forward.1} parent=0
    #allocation3 [shape = 'u8[4096]{0}', space=vmem, size = 0x1000, scoped, tag = 'output window, operand 0']
    #allocation4 [shape = 's32[2]{0}', space=sflag, size = 0x8, scoped, tag = 'scoped memory for model_forward.1']
    %8 = vsyncpa [#allocation4], 0
    %s9 = scalar_lea.sflag [#allocation4], 1
    %10 = vsyncpa %s9, 0
    loop: start=0, step=1, limit=32
    $region2: #{model_forward.1} parent=1 // loop_pre_header
      _
    $region3: #{model_forward.1} parent=1 // loop_header
      %s12 = sphi 0, %s16
      %p13 = scmp.ge.s32.totalorder %s12, 32
      %s19 = sphi 0, %s31
      %s20 = sphi 0, %s27
      %s21 = sphi 0, %s19
      %s22 = sphi 0, %s20
      %s23 = sphi 0, %s21
      %s24 = sphi 0, %s22
      %s34 = sphi 0, %s36
      %s37 = sphi 0, %s34
      %s38 = sphi 0, %s37
      %s54 = sphi 0, %s38
      %s60 = sphi 0, %s62
      %s63 = sphi 0, %s60
      %s64 = sphi 0, %s63
      %s80 = sphi 0, %s64
      %s86 = sphi 0, %s88
      %s89 = sphi 0, %s86
      %s90 = sphi 0, %s89
      %s106 = sphi 0, %s90
      %s112 = sphi 0, %s114
      %s115 = sphi 0, %s112
      %s116 = sphi 0, %s115
      %s132 = sphi 0, %s116
    $region4: #{model_forward.1} parent=1 // loop_header_branch
      %15 = sbr.rel (%p13) target = $region8
    $region5: #{model_forward.1} parent=1 // loop_body
      %s17 = ssub.s32 %s12, 1
      %s18 = ssub.s32 %s12, 2
      %s25 = sadd.s32 1, %s20
      %p26 = scmp.ge.s32.totalorder %s25, 15
      %s27 = scalar_select %p26, 0, %s25
      %s28 = sadd.s32 1, %s19
      %s29 = scalar_select %p26, %s28, %s19
      %p30 = scmp.ge.s32.totalorder %s29, 2
      %s31 = scalar_select %p30, 0, %s29
      %s32 = ssub.s32 %s19, %s31
      %p33 = scmp.eq.s32.totalorder %s32, 0
      %s35 = sadd.s32 %s34, 1
      %s36 = scalar_select %p33, %s34, %s35
      %p39 = pneg %p33
      %p40 = scmp.eq.s32.totalorder %s12, 29
      %p41 = por %p39, %p40
      %p42 = scmp.ne.s32.totalorder %s34, %s37
      %p43 = scmp.eq.s32.totalorder %s12, 0
      %p44 = por %p42, %p43
      %p45 = scmp.ne.s32.totalorder %s34, %s37
      %p46 = scmp.eq.s32.totalorder %s17, 29
      %p47 = por %p45, %p46
      %p48 = scmp.ne.s32.totalorder %s37, %s38
      %p49 = scmp.eq.s32.totalorder %s17, 0
      %p50 = por %p48, %p49
      %p51 = scmp.ne.s32.totalorder %s37, %s38
      %p52 = scmp.eq.s32.totalorder %s18, 29
      %p53 = por %p51, %p52
      %p55 = scmp.ne.s32.totalorder %s38, %s54
      %p56 = scmp.eq.s32.totalorder %s18, 0
      %p57 = por %p55, %p56
      %s58 = ssub.s32 %s20, %s27
      %p59 = scmp.eq.s32.totalorder %s58, 0
      %s61 = sadd.s32 %s60, 1
      %s62 = scalar_select %p59, %s60, %s61
      %p65 = pneg %p59
      %p66 = scmp.eq.s32.totalorder %s12, 29
      %p67 = por %p65, %p66
      %p68 = scmp.ne.s32.totalorder %s60, %s63
      %p69 = scmp.eq.s32.totalorder %s12, 0
      %p70 = por %p68, %p69
      %p71 = scmp.ne.s32.totalorder %s60, %s63
      %p72 = scmp.eq.s32.totalorder %s17, 29
      %p73 = por %p71, %p72
      %p74 = scmp.ne.s32.totalorder %s63, %s64
      %p75 = scmp.eq.s32.totalorder %s17, 0
      %p76 = por %p74, %p75
      %p77 = scmp.ne.s32.totalorder %s63, %s64
      %p78 = scmp.eq.s32.totalorder %s18, 29
      %p79 = por %p77, %p78
      %p81 = scmp.ne.s32.totalorder %s64, %s80
      %p82 = scmp.eq.s32.totalorder %s18, 0
      %p83 = por %p81, %p82
      %s84 = ssub.s32 %s19, %s31
      %p85 = scmp.eq.s32.totalorder %s84, 0
      %s87 = sadd.s32 %s86, 1
      %s88 = scalar_select %p85, %s86, %s87
      %p91 = pneg %p85
      %p92 = scmp.eq.s32.totalorder %s12, 29
      %p93 = por %p91, %p92
      %p94 = scmp.ne.s32.totalorder %s86, %s89
      %p95 = scmp.eq.s32.totalorder %s12, 0
      %p96 = por %p94, %p95
      %p97 = scmp.ne.s32.totalorder %s86, %s89
      %p98 = scmp.eq.s32.totalorder %s17, 29
      %p99 = por %p97, %p98
      %p100 = scmp.ne.s32.totalorder %s89, %s90
      %p101 = scmp.eq.s32.totalorder %s17, 0
      %p102 = por %p100, %p101
      %p103 = scmp.ne.s32.totalorder %s89, %s90
      %p104 = scmp.eq.s32.totalorder %s18, 29
      %p105 = por %p103, %p104
      %p107 = scmp.ne.s32.totalorder %s90, %s106
      %p108 = scmp.eq.s32.totalorder %s18, 0
      %p109 = por %p107, %p108
      %s110 = ssub.s32 %s19, %s31
      %p111 = scmp.eq.s32.totalorder %s110, 0
      %s113 = sadd.s32 %s112, 1
      %s114 = scalar_select %p111, %s112, %s113
      %p117 = pneg %p111
      %p118 = scmp.eq.s32.totalorder %s12, 29
      %p119 = por %p117, %p118
      %p120 = scmp.ne.s32.totalorder %s112, %s115
      %p121 = scmp.eq.s32.totalorder %s12, 0
      %p122 = por %p120, %p121
      %p123 = scmp.ne.s32.totalorder %s112, %s115
      %p124 = scmp.eq.s32.totalorder %s17, 29
      %p125 = por %p123, %p124
      %p126 = scmp.ne.s32.totalorder %s115, %s116
      %p127 = scmp.eq.s32.totalorder %s17, 0
      %p128 = por %p126, %p127
      %p129 = scmp.ne.s32.totalorder %s115, %s116
      %p130 = scmp.eq.s32.totalorder %s18, 29
      %p131 = por %p129, %p130
      %p133 = scmp.ne.s32.totalorder %s116, %s132
      %p134 = scmp.eq.s32.totalorder %s18, 0
      %p135 = por %p133, %p134
      %p136 = scmp.le.s32.totalorder 1, %s12
      %p137 = scmp.lt.s32.totalorder %s12, 31
      %p138 = pnand %p136, %p137
      %p139 = pneg %p138
      // Predicated region
      $region9: #{model_forward.1} parent=5 // pred_check
        _
      $region10: #{model_forward.1} parent=5 // pred_check_branch
        %141 = sbr.rel (%p138) target = $region12
      $region11: #{model_forward.1} parent=5 // pred_region
        %s142 = ssub.s32 %s12, 1
      $region12: #{model_forward.1} parent=5 // pred_fallthru
        _
      %p143 = scmp.lt.s32.totalorder %s12, 30
      // Predicated region
      $region13: #{model_forward.1} parent=5 // pred_check
        %p144 = pneg %p143
      $region14: #{model_forward.1} parent=5 // pred_check_branch
        %146 = sbr.rel (%p144) target = $region16
      $region15: #{model_forward.1} parent=5 // pred_region
        // Predicated region
        $region17: #{model_forward.1} parent=15 // pred_check
          %p147 = pneg %p44
        $region18: #{model_forward.1} parent=15 // pred_check_branch
          %149 = sbr.rel (%p147) target = $region20
        $region19: #{model_forward.1} parent=15 // pred_region
          %p150 = scmp.lt.s32.totalorder %s19, 1
          %s151 = scalar_select %p150, %s19, 1
          %s152 = smul.addr %s151, 32
          %s153 = smul.addr %s152, 8
          %s154 = scalar_lea.vmem %s0, %s153
        $region20: #{model_forward.1} parent=15 // pred_fallthru
          _
        // Predicated region
        $region21: #{model_forward.1} parent=15 // pred_check
          %p155 = pneg %p70
        $region22: #{model_forward.1} parent=15 // pred_check_branch
          %157 = sbr.rel (%p155) target = $region24
        $region23: #{model_forward.1} parent=15 // pred_region
          %p158 = scmp.lt.s32.totalorder %s20, 14
          %s159 = scalar_select %p158, %s20, 14
          %s160 = smul.addr %s159, 30
          %s161 = smul.addr %s160, 8
          %s162 = scalar_lea.vmem %s1, %s161
        $region24: #{model_forward.1} parent=15 // pred_fallthru
          _
        // Predicated region
        $region25: #{model_forward.1} parent=15 // pred_check
          %p163 = pneg %p96
        $region26: #{model_forward.1} parent=15 // pred_check_branch
          %165 = sbr.rel (%p163) target = $region28
        $region27: #{model_forward.1} parent=15 // pred_region
          %p166 = scmp.lt.s32.totalorder %s19, 1
          %s167 = scalar_select %p166, %s19, 1
          %s168 = smul.addr %s167, 4
          %s169 = scalar_lea.vmem %s2, %s168
        $region28: #{model_forward.1} parent=15 // pred_fallthru
          _
      $region16: #{model_forward.1} parent=5 // pred_fallthru
        _
      %p170 = scmp.le.s32.totalorder 1, %s12
      %p171 = scmp.lt.s32.totalorder %s12, 31
      %p172 = pnand %p170, %p171
      %p173 = pneg %p172
      // Predicated region
      $region29: #{model_forward.1} parent=5 // pred_check
        _
      $region30: #{model_forward.1} parent=5 // pred_check_branch
        %175 = sbr.rel (%p172) target = $region32
      $region31: #{model_forward.1} parent=5 // pred_region
        %s176 = ssub.s32 %s12, 1
        %p177 = scmp.lt.s32.totalorder %s21, 1
        %s178 = scalar_select %p177, %s21, 1
        %s179 = smul.addr %s178, 32
        %s180 = smul.addr %s179, 8
        %s181 = scalar_lea.vmem %s0, %s180
        %p182 = pneg %p50
        %p183 = pneg %p47
        %p184 = scmp.lt.s32.totalorder %s22, 14
        %s185 = scalar_select %p184, %s22, 14
        %s186 = smul.addr %s185, 30
        %s187 = smul.addr %s186, 8
        %s188 = scalar_lea.vmem %s1, %s187
        %p189 = pneg %p76
        %p190 = pneg %p73
        %p191 = scmp.lt.s32.totalorder %s21, 1
        %s192 = scalar_select %p191, %s21, 1
        %s193 = smul.addr %s192, 4
        %s194 = scalar_lea.vmem %s2, %s193
        %p195 = pneg %p102
        %p196 = pneg %p99
        %p197 = pneg %p128
        %p198 = pneg %p125
        %s199 = sand.u32 %s115, 1
        %s200 = scalar_lea.sflag [#allocation4], %s199
        %s201 = sand.u32 %s115, 1
        %s202 = smul.addr %s201, 4
        %s203 = scalar_lea.vmem [#allocation3], %s202
        %p204 = scmp.lt.s32.totalorder %s21, 1
        %s205 = scalar_select %p204, %s21, 1
        %s206 = smul.addr %s205, 32
        %s207 = smul.addr %s206, 8
        %s208 = scalar_lea.vmem %s0, %s207
        %p209 = scmp.lt.s32.totalorder %s22, 14
        %s210 = scalar_select %p209, %s22, 14
        %s211 = smul.addr %s210, 30
        %s212 = smul.addr %s211, 8
        %s213 = scalar_lea.vmem %s1, %s212
        %p214 = scmp.lt.s32.totalorder %s21, 1
        %s215 = scalar_select %p214, %s21, 1
        %s216 = smul.addr %s215, 4
        %s217 = scalar_lea.vmem %s2, %s216
        %p218 = scmp.eq.s32.totalorder %s22, 0
        // Predicated region
        $region33: #{model_forward.1} parent=31 // pred_check
          %p219 = pneg %p218
        $region34: #{model_forward.1} parent=31 // pred_check_branch
          %221 = sbr.rel (%p219) target = $region36
        $region35: #{model_forward.1} parent=31 // pred_region
          %222 = vst [vmem:[#allocation2] sm:$0xf] 0.0
        $region36: #{model_forward.1} parent=31 // pred_fallthru
          _
        %s223 = smul.u32 %s22, 16
        %s224 = scalar_lea.vmem %s208, %s223
        %v225 = vld [vmem:[%s224] sm:$0xff]
        %v226 = vld [vmem:[%s224 + $0x8] sm:$0xff]
        %v227 = vld [vmem:[%s224 + $0x10] sm:$0xff]
        %v228 = vld [vmem:[%s224 + $0x18] sm:$0xff]
        %v229 = vld [vmem:[#allocation2] sm:$0xf]
        %v230 = vld [vmem:[%s213] sm:$0xff]
        %v231 = vld [vmem:[%s213 + $0x8] sm:$0xff]
        %v234 = vcombine.low %v225, %v227
        %v236 = vunpack.c.l.s4 1983009808
        %v237 = vunpack.c.0.s8 %v236
        %v238 = vlaneseq
        %v239 = vshrl.u32 %v238, 7
        %v240 = vsub.s32 %v237, %v239
        %v241 = vrot.slane %v234, %v240
        %vm242 = vcmask 130048
        %v243 = vsel %vm242, %v241, 0
        %245 = vmatprep.subr.mxu0 0.0
        %246 = vmatpush1.msra.mxu0 %v230
        %247 = vmatprep.subr.mxu0 0.0
        %248 = vmatpush1.msra.mxu0 %v231
        %249 = vmatprep.subr.mxu0 0.0
        %250 = vmatpush1.msra.mxu0 0.0
        %251 = vmatprep.subr.mxu0 0.0
        %252 = vmatpush1.msra.mxu0 0.0
        %253 = vmatprep.subr.mxu0 0.0
        %254 = vmatpush1.msra.mxu0 0.0
        %255 = vmatprep.subr.mxu0 0.0
        %256 = vmatpush1.msra.mxu0 0.0
        %257 = vmatprep.subr.mxu0 0.0
        %258 = vmatpush1.msra.mxu0 0.0
        %259 = vmatprep.subr.mxu0 0.0
        %260 = vmatpush1.msra.mxu0 0.0
        %261 = vmatprep.subr.mxu0 0.0
        %262 = vmatpush1.msra.mxu0 0.0
        %263 = vmatprep.subr.mxu0 0.0
        %264 = vmatpush1.msra.mxu0 0.0
        %265 = vmatprep.subr.mxu0 0.0
        %266 = vmatpush1.msra.mxu0 0.0
        %267 = vmatprep.subr.mxu0 0.0
        %268 = vmatpush1.msra.mxu0 0.0
        %269 = vmatprep.subr.mxu0 0.0
        %270 = vmatpush1.msra.mxu0 0.0
        %271 = vmatprep.subr.mxu0 0.0
        %272 = vmatpush1.msra.mxu0 0.0
        %273 = vmatprep.subr.mxu0 0.0
        %274 = vmatpush1.msra.mxu0 0.0
        %275 = vmatprep.subr.mxu0 0.0
        %276 = vmatpush1.msra.mxu0 0.0
        %277 = vmatprep.subr.mxu0 0.0
        %278 = vmatpush1.msra.mxu0 0.0
        %279 = vmatprep.subr.mxu0 0.0
        %280 = vmatpush1.msra.mxu0 0.0
        %281 = vmatprep.subr.mxu0 0.0
        %282 = vmatpush1.msra.mxu0 0.0
        %283 = vmatprep.subr.mxu0 0.0
        %284 = vmatpush1.msra.mxu0 0.0
        %285 = vmatprep.subr.mxu0 0.0
        %286 = vmatpush1.msra.mxu0 0.0
        %287 = vmatprep.subr.mxu0 0.0
        %288 = vmatpush1.msra.mxu0 0.0
        %289 = vmatprep.subr.mxu0 0.0
        %290 = vmatpush1.msra.mxu0 0.0
        %291 = vmatprep.subr.mxu0 0.0
        %292 = vmatpush1.msra.mxu0 0.0
        %293 = vmatprep.subr.mxu0 0.0
        %294 = vmatpush1.msra.mxu0 0.0
        %295 = vmatprep.subr.mxu0 0.0
        %296 = vmatpush1.msra.mxu0 0.0
        %297 = vmatprep.subr.mxu0 0.0
        %298 = vmatpush1.msra.mxu0 0.0
        %299 = vmatprep.subr.mxu0 0.0
        %300 = vmatpush1.msra.mxu0 0.0
        %301 = vmatprep.subr.mxu0 0.0
        %302 = vmatpush1.msra.mxu0 0.0
        %303 = vmatprep.subr.mxu0 0.0
        %304 = vmatpush1.msra.mxu0 0.0
        %305 = vmatprep.subr.mxu0 0.0
        %306 = vmatpush1.msra.mxu0 0.0
        %307 = vmatprep.subr.mxu0 0.0
        %308 = vmatpush1.msra.mxu0 0.0
        %309 = vmatprep.mubr.f32.mxu0 0.0
        %310 = vmatmul.mubr.f32.gmra.mrb[0].mxu0 %v243
        %v311 = vpop.f32.mrb[0].mxu0
        %v312 = vadd.f32 0.0, %v311
        %v313 = vpop.f32.mrb[0].mxu0
        %314 = vdwg.mxu0
        %v315 = vadd.f32 %v229, %v312
        %v317 = vunpack.c.l.s4 1983009808
        %v318 = vunpack.c.0.s8 %v317
        %v319 = vlaneseq
        %v320 = vshrl.u32 %v319, 7
        %v321 = vsub.s32 %v318, %v320
        %v322 = vrot.slane %v225, %v321
        %v323 = vcombine.high %v322, %v322
        %v325 = vunpack.c.l.s4 1983009808
        %v326 = vunpack.c.0.s8 %v325
        %v327 = vlaneseq
        %v328 = vshrl.u32 %v327, 7
        %v329 = vsub.s32 %v326, %v328
        %v330 = vrot.slane %v227, %v329
        %v331 = vcombine.high %v330, %v330
        %vm332 = vcmask 1040384
        %vm333 = vcmask 1042434
        %vm334 = vmor %vm332, %vm333
        %vm335 = vcmask 1044484
        %vm336 = vmor %vm334, %vm335
        %vm337 = vcmask 1046534
        %vm338 = vmor %vm336, %vm337
        %v339 = vrot.slane %v322, 7
        %v340 = vrot.slane %v339, 2
        %v341 = vrot.slane %v323, 7
        %v342 = vsel %vm338, %v340, %v341
        %v343 = vrot.slane %v330, 7
        %v344 = vrot.slane %v343, 2
        %v345 = vrot.slane %v331, 7
        %v346 = vsel %vm338, %v344, %v345
        %s347 = scalar_lea.vmem %s213, 16
        %v348 = vld [vmem:[%s347] sm:$0xff]
        %v349 = vld [vmem:[%s347 + $0x8] sm:$0xff]
        %v350 = vcombine.low %v342, %v346
        %v352 = vunpack.c.l.s4 1983009808
        %v353 = vunpack.c.0.s8 %v352
        %v354 = vlaneseq
        %v355 = vshrl.u32 %v354, 7
        %v356 = vsub.s32 %v353, %v355
        %v357 = vrot.slane %v350, %v356
        %v358 = vsel %vm242, %v357, 0
        %360 = vmatprep.subr.mxu0 0.0
        %361 = vmatpush1.msra.mxu0 %v348
        %362 = vmatprep.subr.mxu0 0.0
        %363 = vmatpush1.msra.mxu0 %v349
        %364 = vmatprep.subr.mxu0 0.0
        %365 = vmatpush1.msra.mxu0 0.0
        %366 = vmatprep.subr.mxu0 0.0
        %367 = vmatpush1.msra.mxu0 0.0
        %368 = vmatprep.subr.mxu0 0.0
        %369 = vmatpush1.msra.mxu0 0.0
        %370 = vmatprep.subr.mxu0 0.0
        %371 = vmatpush1.msra.mxu0 0.0
        %372 = vmatprep.subr.mxu0 0.0
        %373 = vmatpush1.msra.mxu0 0.0
        %374 = vmatprep.subr.mxu0 0.0
        %375 = vmatpush1.msra.mxu0 0.0
        %376 = vmatprep.subr.mxu0 0.0
        %377 = vmatpush1.msra.mxu0 0.0
        %378 = vmatprep.subr.mxu0 0.0
        %379 = vmatpush1.msra.mxu0 0.0
        %380 = vmatprep.subr.mxu0 0.0
        %381 = vmatpush1.msra.mxu0 0.0
        %382 = vmatprep.subr.mxu0 0.0
        %383 = vmatpush1.msra.mxu0 0.0
        %384 = vmatprep.subr.mxu0 0.0
        %385 = vmatpush1.msra.mxu0 0.0
        %386 = vmatprep.subr.mxu0 0.0
        %387 = vmatpush1.msra.mxu0 0.0
        %388 = vmatprep.subr.mxu0 0.0
        %389 = vmatpush1.msra.mxu0 0.0
        %390 = vmatprep.subr.mxu0 0.0
        %391 = vmatpush1.msra.mxu0 0.0
        %392 = vmatprep.subr.mxu0 0.0
        %393 = vmatpush1.msra.mxu0 0.0
        %394 = vmatprep.subr.mxu0 0.0
        %395 = vmatpush1.msra.mxu0 0.0
        %396 = vmatprep.subr.mxu0 0.0
        %397 = vmatpush1.msra.mxu0 0.0
        %398 = vmatprep.subr.mxu0 0.0
        %399 = vmatpush1.msra.mxu0 0.0
        %400 = vmatprep.subr.mxu0 0.0
        %401 = vmatpush1.msra.mxu0 0.0
        %402 = vmatprep.subr.mxu0 0.0
        %403 = vmatpush1.msra.mxu0 0.0
        %404 = vmatprep.subr.mxu0 0.0
        %405 = vmatpush1.msra.mxu0 0.0
        %406 = vmatprep.subr.mxu0 0.0
        %407 = vmatpush1.msra.mxu0 0.0
        %408 = vmatprep.subr.mxu0 0.0
        %409 = vmatpush1.msra.mxu0 0.0
        %410 = vmatprep.subr.mxu0 0.0
        %411 = vmatpush1.msra.mxu0 0.0
        %412 = vmatprep.subr.mxu0 0.0
        %413 = vmatpush1.msra.mxu0 0.0
        %414 = vmatprep.subr.mxu0 0.0
        %415 = vmatpush1.msra.mxu0 0.0
        %416 = vmatprep.subr.mxu0 0.0
        %417 = vmatpush1.msra.mxu0 0.0
        %418 = vmatprep.subr.mxu0 0.0
        %419 = vmatpush1.msra.mxu0 0.0
        %420 = vmatprep.subr.mxu0 0.0
        %421 = vmatpush1.msra.mxu0 0.0
        %422 = vmatprep.subr.mxu0 0.0
        %423 = vmatpush1.msra.mxu0 0.0
        %424 = vmatprep.mubr.f32.mxu0 0.0
        %425 = vmatmul.mubr.f32.gmra.mrb[0].mxu0 %v358
        %v426 = vpop.f32.mrb[0].mxu0
        %v427 = vadd.f32 0.0, %v426
        %v428 = vpop.f32.mrb[0].mxu0
        %429 = vdwg.mxu0
        %v430 = vadd.f32 %v315, %v427
        %s431 = scalar_lea.vmem %s213, 32
        %v432 = vld [vmem:[%s431] sm:$0xff]
        %v433 = vld [vmem:[%s431 + $0x8] sm:$0xff]
        %v434 = vcombine.low %v323, %v331
        %v436 = vunpack.c.l.s4 1983009808
        %v437 = vunpack.c.0.s8 %v436
        %v438 = vlaneseq
        %v439 = vshrl.u32 %v438, 7
        %v440 = vsub.s32 %v437, %v439
        %v441 = vrot.slane %v434, %v440
        %v442 = vsel %vm242, %v441, 0
        %444 = vmatprep.subr.mxu0 0.0
        %445 = vmatpush1.msra.mxu0 %v432
        %446 = vmatprep.subr.mxu0 0.0
        %447 = vmatpush1.msra.mxu0 %v433
        %448 = vmatprep.subr.mxu0 0.0
        %449 = vmatpush1.msra.mxu0 0.0
        %450 = vmatprep.subr.mxu0 0.0
        %451 = vmatpush1.msra.mxu0 0.0
        %452 = vmatprep.subr.mxu0 0.0
        %453 = vmatpush1.msra.mxu0 0.0
        %454 = vmatprep.subr.mxu0 0.0
        %455 = vmatpush1.msra.mxu0 0.0
        %456 = vmatprep.subr.mxu0 0.0
        %457 = vmatpush1.msra.mxu0 0.0
        %458 = vmatprep.subr.mxu0 0.0
        %459 = vmatpush1.msra.mxu0 0.0
        %460 = vmatprep.subr.mxu0 0.0
        %461 = vmatpush1.msra.mxu0 0.0
        %462 = vmatprep.subr.mxu0 0.0
        %463 = vmatpush1.msra.mxu0 0.0
        %464 = vmatprep.subr.mxu0 0.0
        %465 = vmatpush1.msra.mxu0 0.0
        %466 = vmatprep.subr.mxu0 0.0
        %467 = vmatpush1.msra.mxu0 0.0
        %468 = vmatprep.subr.mxu0 0.0
        %469 = vmatpush1.msra.mxu0 0.0
        %470 = vmatprep.subr.mxu0 0.0
        %471 = vmatpush1.msra.mxu0 0.0
        %472 = vmatprep.subr.mxu0 0.0
        %473 = vmatpush1.msra.mxu0 0.0
        %474 = vmatprep.subr.mxu0 0.0
        %475 = vmatpush1.msra.mxu0 0.0
        %476 = vmatprep.subr.mxu0 0.0
        %477 = vmatpush1.msra.mxu0 0.0
        %478 = vmatprep.subr.mxu0 0.0
        %479 = vmatpush1.msra.mxu0 0.0
        %480 = vmatprep.subr.mxu0 0.0
        %481 = vmatpush1.msra.mxu0 0.0
        %482 = vmatprep.subr.mxu0 0.0
        %483 = vmatpush1.msra.mxu0 0.0
        %484 = vmatprep.subr.mxu0 0.0
        %485 = vmatpush1.msra.mxu0 0.0
        %486 = vmatprep.subr.mxu0 0.0
        %487 = vmatpush1.msra.mxu0 0.0
        %488 = vmatprep.subr.mxu0 0.0
        %489 = vmatpush1.msra.mxu0 0.0
        %490 = vmatprep.subr.mxu0 0.0
        %491 = vmatpush1.msra.mxu0 0.0
        %492 = vmatprep.subr.mxu0 0.0
        %493 = vmatpush1.msra.mxu0 0.0
        %494 = vmatprep.subr.mxu0 0.0
        %495 = vmatpush1.msra.mxu0 0.0
        %496 = vmatprep.subr.mxu0 0.0
        %497 = vmatpush1.msra.mxu0 0.0
        %498 = vmatprep.subr.mxu0 0.0
        %499 = vmatpush1.msra.mxu0 0.0
        %500 = vmatprep.subr.mxu0 0.0
        %501 = vmatpush1.msra.mxu0 0.0
        %502 = vmatprep.subr.mxu0 0.0
        %503 = vmatpush1.msra.mxu0 0.0
        %504 = vmatprep.subr.mxu0 0.0
        %505 = vmatpush1.msra.mxu0 0.0
        %506 = vmatprep.subr.mxu0 0.0
        %507 = vmatpush1.msra.mxu0 0.0
        %508 = vmatprep.mubr.f32.mxu0 0.0
        %509 = vmatmul.mubr.f32.gmra.mrb[0].mxu0 %v442
        %v510 = vpop.f32.mrb[0].mxu0
        %v511 = vadd.f32 0.0, %v510
        %v512 = vpop.f32.mrb[0].mxu0
        %513 = vdwg.mxu0
        %v514 = vadd.f32 %v430, %v511
        %v515 = vcombine.high %v225, %v225
        %v517 = vunpack.c.l.s4 1983009808
        %v518 = vunpack.c.0.s8 %v517
        %v519 = vlaneseq
        %v520 = vshrl.u32 %v519, 7
        %v521 = vsub.s32 %v518, %v520
        %v522 = vrot.slane %v515, %v521
        %v523 = vcombine.high %v227, %v227
        %v525 = vunpack.c.l.s4 1983009808
        %v526 = vunpack.c.0.s8 %v525
        %v527 = vlaneseq
        %v528 = vshrl.u32 %v527, 7
        %v529 = vsub.s32 %v526, %v528
        %v530 = vrot.slane %v523, %v529
        %v531 = vrot.slane %v341, 2
        %v532 = vrot.slane %v522, 7
        %v533 = vsel %vm338, %v531, %v532
        %v534 = vrot.slane %v345, 2
        %v535 = vrot.slane %v530, 7
        %v536 = vsel %vm338, %v534, %v535
        %s537 = scalar_lea.vmem %s213, 48
        %v538 = vld [vmem:[%s537] sm:$0xff]
        %v539 = vld [vmem:[%s537 + $0x8] sm:$0xff]
        %v540 = vcombine.low %v533, %v536
        %v542 = vunpack.c.l.s4 1983009808
        %v543 = vunpack.c.0.s8 %v542
        %v544 = vlaneseq
        %v545 = vshrl.u32 %v544, 7
        %v546 = vsub.s32 %v543, %v545
        %v547 = vrot.slane %v540, %v546
        %v548 = vsel %vm242, %v547, 0
        %550 = vmatprep.subr.mxu0 0.0
        %551 = vmatpush1.msra.mxu0 %v538
        %552 = vmatprep.subr.mxu0 0.0
        %553 = vmatpush1.msra.mxu0 %v539
        %554 = vmatprep.subr.mxu0 0.0
        %555 = vmatpush1.msra.mxu0 0.0
        %556 = vmatprep.subr.mxu0 0.0
        %557 = vmatpush1.msra.mxu0 0.0
        %558 = vmatprep.subr.mxu0 0.0
        %559 = vmatpush1.msra.mxu0 0.0
        %560 = vmatprep.subr.mxu0 0.0
        %561 = vmatpush1.msra.mxu0 0.0
        %562 = vmatprep.subr.mxu0 0.0
        %563 = vmatpush1.msra.mxu0 0.0
        %564 = vmatprep.subr.mxu0 0.0
        %565 = vmatpush1.msra.mxu0 0.0
        %566 = vmatprep.subr.mxu0 0.0
        %567 = vmatpush1.msra.mxu0 0.0
        %568 = vmatprep.subr.mxu0 0.0
        %569 = vmatpush1.msra.mxu0 0.0
        %570 = vmatprep.subr.mxu0 0.0
        %571 = vmatpush1.msra.mxu0 0.0
        %572 = vmatprep.subr.mxu0 0.0
        %573 = vmatpush1.msra.mxu0 0.0
        %574 = vmatprep.subr.mxu0 0.0
        %575 = vmatpush1.msra.mxu0 0.0
        %576 = vmatprep.subr.mxu0 0.0
        %577 = vmatpush1.msra.mxu0 0.0
        %578 = vmatprep.subr.mxu0 0.0
        %579 = vmatpush1.msra.mxu0 0.0
        %580 = vmatprep.subr.mxu0 0.0
        %581 = vmatpush1.msra.mxu0 0.0
        %582 = vmatprep.subr.mxu0 0.0
        %583 = vmatpush1.msra.mxu0 0.0
        %584 = vmatprep.subr.mxu0 0.0
        %585 = vmatpush1.msra.mxu0 0.0
        %586 = vmatprep.subr.mxu0 0.0
        %587 = vmatpush1.msra.mxu0 0.0
        %588 = vmatprep.subr.mxu0 0.0
        %589 = vmatpush1.msra.mxu0 0.0
        %590 = vmatprep.subr.mxu0 0.0
        %591 = vmatpush1.msra.mxu0 0.0
        %592 = vmatprep.subr.mxu0 0.0
        %593 = vmatpush1.msra.mxu0 0.0
        %594 = vmatprep.subr.mxu0 0.0
        %595 = vmatpush1.msra.mxu0 0.0
        %596 = vmatprep.subr.mxu0 0.0
        %597 = vmatpush1.msra.mxu0 0.0
        %598 = vmatprep.subr.mxu0 0.0
        %599 = vmatpush1.msra.mxu0 0.0
        %600 = vmatprep.subr.mxu0 0.0
        %601 = vmatpush1.msra.mxu0 0.0
        %602 = vmatprep.subr.mxu0 0.0
        %603 = vmatpush1.msra.mxu0 0.0
        %604 = vmatprep.subr.mxu0 0.0
        %605 = vmatpush1.msra.mxu0 0.0
        %606 = vmatprep.subr.mxu0 0.0
        %607 = vmatpush1.msra.mxu0 0.0
        %608 = vmatprep.subr.mxu0 0.0
        %609 = vmatpush1.msra.mxu0 0.0
        %610 = vmatprep.subr.mxu0 0.0
        %611 = vmatpush1.msra.mxu0 0.0
        %612 = vmatprep.subr.mxu0 0.0
        %613 = vmatpush1.msra.mxu0 0.0
        %614 = vmatprep.mubr.f32.mxu0 0.0
        %615 = vmatmul.mubr.f32.gmra.mrb[0].mxu0 %v548
        %v616 = vpop.f32.mrb[0].mxu0
        %v617 = vadd.f32 0.0, %v616
        %v618 = vpop.f32.mrb[0].mxu0
        %619 = vdwg.mxu0
        %v620 = vadd.f32 %v514, %v617
        %s621 = scalar_lea.vmem %s213, 64
        %v622 = vld [vmem:[%s621] sm:$0xff]
        %v623 = vld [vmem:[%s621 + $0x8] sm:$0xff]
        %v624 = vcombine.low %v522, %v530
        %v626 = vunpack.c.l.s4 1983009808
        %v627 = vunpack.c.0.s8 %v626
        %v628 = vlaneseq
        %v629 = vshrl.u32 %v628, 7
        %v630 = vsub.s32 %v627, %v629
        %v631 = vrot.slane %v624, %v630
        %v632 = vsel %vm242, %v631, 0
        %634 = vmatprep.subr.mxu0 0.0
        %635 = vmatpush1.msra.mxu0 %v622
        %636 = vmatprep.subr.mxu0 0.0
        %637 = vmatpush1.msra.mxu0 %v623
        %638 = vmatprep.subr.mxu0 0.0
        %639 = vmatpush1.msra.mxu0 0.0
        %640 = vmatprep.subr.mxu0 0.0
        %641 = vmatpush1.msra.mxu0 0.0
        %642 = vmatprep.subr.mxu0 0.0
        %643 = vmatpush1.msra.mxu0 0.0
        %644 = vmatprep.subr.mxu0 0.0
        %645 = vmatpush1.msra.mxu0 0.0
        %646 = vmatprep.subr.mxu0 0.0
        %647 = vmatpush1.msra.mxu0 0.0
        %648 = vmatprep.subr.mxu0 0.0
        %649 = vmatpush1.msra.mxu0 0.0
        %650 = vmatprep.subr.mxu0 0.0
        %651 = vmatpush1.msra.mxu0 0.0
        %652 = vmatprep.subr.mxu0 0.0
        %653 = vmatpush1.msra.mxu0 0.0
        %654 = vmatprep.subr.mxu0 0.0
        %655 = vmatpush1.msra.mxu0 0.0
        %656 = vmatprep.subr.mxu0 0.0
        %657 = vmatpush1.msra.mxu0 0.0
        %658 = vmatprep.subr.mxu0 0.0
        %659 = vmatpush1.msra.mxu0 0.0
        %660 = vmatprep.subr.mxu0 0.0
        %661 = vmatpush1.msra.mxu0 0.0
        %662 = vmatprep.subr.mxu0 0.0
        %663 = vmatpush1.msra.mxu0 0.0
        %664 = vmatprep.subr.mxu0 0.0
        %665 = vmatpush1.msra.mxu0 0.0
        %666 = vmatprep.subr.mxu0 0.0
        %667 = vmatpush1.msra.mxu0 0.0
        %668 = vmatprep.subr.mxu0 0.0
        %669 = vmatpush1.msra.mxu0 0.0
        %670 = vmatprep.subr.mxu0 0.0
        %671 = vmatpush1.msra.mxu0 0.0
        %672 = vmatprep.subr.mxu0 0.0
        %673 = vmatpush1.msra.mxu0 0.0
        %674 = vmatprep.subr.mxu0 0.0
        %675 = vmatpush1.msra.mxu0 0.0
        %676 = vmatprep.subr.mxu0 0.0
        %677 = vmatpush1.msra.mxu0 0.0
        %678 = vmatprep.subr.mxu0 0.0
        %679 = vmatpush1.msra.mxu0 0.0
        %680 = vmatprep.subr.mxu0 0.0
        %681 = vmatpush1.msra.mxu0 0.0
        %682 = vmatprep.subr.mxu0 0.0
        %683 = vmatpush1.msra.mxu0 0.0
        %684 = vmatprep.subr.mxu0 0.0
        %685 = vmatpush1.msra.mxu0 0.0
        %686 = vmatprep.subr.mxu0 0.0
        %687 = vmatpush1.msra.mxu0 0.0
        %688 = vmatprep.subr.mxu0 0.0
        %689 = vmatpush1.msra.mxu0 0.0
        %690 = vmatprep.subr.mxu0 0.0
        %691 = vmatpush1.msra.mxu0 0.0
        %692 = vmatprep.subr.mxu0 0.0
        %693 = vmatpush1.msra.mxu0 0.0
        %694 = vmatprep.subr.mxu0 0.0
        %695 = vmatpush1.msra.mxu0 0.0
        %696 = vmatprep.subr.mxu0 0.0
        %697 = vmatpush1.msra.mxu0 0.0
        %698 = vmatprep.mubr.f32.mxu0 0.0
        %699 = vmatmul.mubr.f32.gmra.mrb[0].mxu0 %v632
        %v700 = vpop.f32.mrb[0].mxu0
        %v701 = vadd.f32 0.0, %v700
        %v702 = vpop.f32.mrb[0].mxu0
        %703 = vdwg.mxu0
        %v704 = vadd.f32 %v620, %v701
        %v705 = vcombine.high %v522, %v522
        %v706 = vcombine.high %v530, %v530
        %v707 = vrot.slane %v532, 2
        %v708 = vrot.slane %v705, 7
        %v709 = vsel %vm338, %v707, %v708
        %v710 = vrot.slane %v535, 2
        %v711 = vrot.slane %v706, 7
        %v712 = vsel %vm338, %v710, %v711
        %s713 = scalar_lea.vmem %s213, 80
        %v714 = vld [vmem:[%s713] sm:$0xff]
        %v715 = vld [vmem:[%s713 + $0x8] sm:$0xff]
        %v716 = vcombine.low %v709, %v712
        %v718 = vunpack.c.l.s4 1983009808
        %v719 = vunpack.c.0.s8 %v718
        %v720 = vlaneseq
        %v721 = vshrl.u32 %v720, 7
        %v722 = vsub.s32 %v719, %v721
        %v723 = vrot.slane %v716, %v722
        %v724 = vsel %vm242, %v723, 0
        %726 = vmatprep.subr.mxu0 0.0
        %727 = vmatpush1.msra.mxu0 %v714
        %728 = vmatprep.subr.mxu0 0.0
        %729 = vmatpush1.msra.mxu0 %v715
        %730 = vmatprep.subr.mxu0 0.0
        %731 = vmatpush1.msra.mxu0 0.0
        %732 = vmatprep.subr.mxu0 0.0
        %733 = vmatpush1.msra.mxu0 0.0
        %734 = vmatprep.subr.mxu0 0.0
        %735 = vmatpush1.msra.mxu0 0.0
        %736 = vmatprep.subr.mxu0 0.0
        %737 = vmatpush1.msra.mxu0 0.0
        %738 = vmatprep.subr.mxu0 0.0
        %739 = vmatpush1.msra.mxu0 0.0
        %740 = vmatprep.subr.mxu0 0.0
        %741 = vmatpush1.msra.mxu0 0.0
        %742 = vmatprep.subr.mxu0 0.0
        %743 = vmatpush1.msra.mxu0 0.0
        %744 = vmatprep.subr.mxu0 0.0
        %745 = vmatpush1.msra.mxu0 0.0
        %746 = vmatprep.subr.mxu0 0.0
        %747 = vmatpush1.msra.mxu0 0.0
        %748 = vmatprep.subr.mxu0 0.0
        %749 = vmatpush1.msra.mxu0 0.0
        %750 = vmatprep.subr.mxu0 0.0
        %751 = vmatpush1.msra.mxu0 0.0
        %752 = vmatprep.subr.mxu0 0.0
        %753 = vmatpush1.msra.mxu0 0.0
        %754 = vmatprep.subr.mxu0 0.0
        %755 = vmatpush1.msra.mxu0 0.0
        %756 = vmatprep.subr.mxu0 0.0
        %757 = vmatpush1.msra.mxu0 0.0
        %758 = vmatprep.subr.mxu0 0.0
        %759 = vmatpush1.msra.mxu0 0.0
        %760 = vmatprep.subr.mxu0 0.0
        %761 = vmatpush1.msra.mxu0 0.0
        %762 = vmatprep.subr.mxu0 0.0
        %763 = vmatpush1.msra.mxu0 0.0
        %764 = vmatprep.subr.mxu0 0.0
        %765 = vmatpush1.msra.mxu0 0.0
        %766 = vmatprep.subr.mxu0 0.0
        %767 = vmatpush1.msra.mxu0 0.0
        %768 = vmatprep.subr.mxu0 0.0
        %769 = vmatpush1.msra.mxu0 0.0
        %770 = vmatprep.subr.mxu0 0.0
        %771 = vmatpush1.msra.mxu0 0.0
        %772 = vmatprep.subr.mxu0 0.0
        %773 = vmatpush1.msra.mxu0 0.0
        %774 = vmatprep.subr.mxu0 0.0
        %775 = vmatpush1.msra.mxu0 0.0
        %776 = vmatprep.subr.mxu0 0.0
        %777 = vmatpush1.msra.mxu0 0.0
        %778 = vmatprep.subr.mxu0 0.0
        %779 = vmatpush1.msra.mxu0 0.0
        %780 = vmatprep.subr.mxu0 0.0
        %781 = vmatpush1.msra.mxu0 0.0
        %782 = vmatprep.subr.mxu0 0.0
        %783 = vmatpush1.msra.mxu0 0.0
        %784 = vmatprep.subr.mxu0 0.0
        %785 = vmatpush1.msra.mxu0 0.0
        %786 = vmatprep.subr.mxu0 0.0
        %787 = vmatpush1.msra.mxu0 0.0
        %788 = vmatprep.subr.mxu0 0.0
        %789 = vmatpush1.msra.mxu0 0.0
        %790 = vmatprep.mubr.f32.mxu0 0.0
        %791 = vmatmul.mubr.f32.gmra.mrb[0].mxu0 %v724
        %v792 = vpop.f32.mrb[0].mxu0
        %v793 = vadd.f32 0.0, %v792
        %v794 = vpop.f32.mrb[0].mxu0
        %795 = vdwg.mxu0
        %v796 = vadd.f32 %v704, %v793
        %s797 = scalar_lea.vmem %s213, 96
        %v798 = vld [vmem:[%s797] sm:$0xff]
        %v799 = vld [vmem:[%s797 + $0x8] sm:$0xff]
        %v800 = vcombine.low %v705, %v706
        %v802 = vunpack.c.l.s4 1983009808
        %v803 = vunpack.c.0.s8 %v802
        %v804 = vlaneseq
        %v805 = vshrl.u32 %v804, 7
        %v806 = vsub.s32 %v803, %v805
        %v807 = vrot.slane %v800, %v806
        %v808 = vsel %vm242, %v807, 0
        %810 = vmatprep.subr.mxu0 0.0
        %811 = vmatpush1.msra.mxu0 %v798
        %812 = vmatprep.subr.mxu0 0.0
        %813 = vmatpush1.msra.mxu0 %v799
        %814 = vmatprep.subr.mxu0 0.0
        %815 = vmatpush1.msra.mxu0 0.0
        %816 = vmatprep.subr.mxu0 0.0
        %817 = vmatpush1.msra.mxu0 0.0
        %818 = vmatprep.subr.mxu0 0.0
        %819 = vmatpush1.msra.mxu0 0.0
        %820 = vmatprep.subr.mxu0 0.0
        %821 = vmatpush1.msra.mxu0 0.0
        %822 = vmatprep.subr.mxu0 0.0
        %823 = vmatpush1.msra.mxu0 0.0
        %824 = vmatprep.subr.mxu0 0.0
        %825 = vmatpush1.msra.mxu0 0.0
        %826 = vmatprep.subr.mxu0 0.0
        %827 = vmatpush1.msra.mxu0 0.0
        %828 = vmatprep.subr.mxu0 0.0
        %829 = vmatpush1.msra.mxu0 0.0
        %830 = vmatprep.subr.mxu0 0.0
        %831 = vmatpush1.msra.mxu0 0.0
        %832 = vmatprep.subr.mxu0 0.0
        %833 = vmatpush1.msra.mxu0 0.0
        %834 = vmatprep.subr.mxu0 0.0
        %835 = vmatpush1.msra.mxu0 0.0
        %836 = vmatprep.subr.mxu0 0.0
        %837 = vmatpush1.msra.mxu0 0.0
        %838 = vmatprep.subr.mxu0 0.0
        %839 = vmatpush1.msra.mxu0 0.0
        %840 = vmatprep.subr.mxu0 0.0
        %841 = vmatpush1.msra.mxu0 0.0
        %842 = vmatprep.subr.mxu0 0.0
        %843 = vmatpush1.msra.mxu0 0.0
        %844 = vmatprep.subr.mxu0 0.0
        %845 = vmatpush1.msra.mxu0 0.0
        %846 = vmatprep.subr.mxu0 0.0
        %847 = vmatpush1.msra.mxu0 0.0
        %848 = vmatprep.subr.mxu0 0.0
        %849 = vmatpush1.msra.mxu0 0.0
        %850 = vmatprep.subr.mxu0 0.0
        %851 = vmatpush1.msra.mxu0 0.0
        %852 = vmatprep.subr.mxu0 0.0
        %853 = vmatpush1.msra.mxu0 0.0
        %854 = vmatprep.subr.mxu0 0.0
        %855 = vmatpush1.msra.mxu0 0.0
        %856 = vmatprep.subr.mxu0 0.0
        %857 = vmatpush1.msra.mxu0 0.0
        %858 = vmatprep.subr.mxu0 0.0
        %859 = vmatpush1.msra.mxu0 0.0
        %860 = vmatprep.subr.mxu0 0.0
        %861 = vmatpush1.msra.mxu0 0.0
        %862 = vmatprep.subr.mxu0 0.0
        %863 = vmatpush1.msra.mxu0 0.0
        %864 = vmatprep.subr.mxu0 0.0
        %865 = vmatpush1.msra.mxu0 0.0
        %866 = vmatprep.subr.mxu0 0.0
        %867 = vmatpush1.msra.mxu0 0.0
        %868 = vmatprep.subr.mxu0 0.0
        %869 = vmatpush1.msra.mxu0 0.0
        %870 = vmatprep.subr.mxu0 0.0
        %871 = vmatpush1.msra.mxu0 0.0
        %872 = vmatprep.subr.mxu0 0.0
        %873 = vmatpush1.msra.mxu0 0.0
        %874 = vmatprep.mubr.f32.mxu0 0.0
        %875 = vmatmul.mubr.f32.gmra.mrb[0].mxu0 %v808
        %v876 = vpop.f32.mrb[0].mxu0
        %v877 = vadd.f32 0.0, %v876
        %v878 = vpop.f32.mrb[0].mxu0
        %879 = vdwg.mxu0
        %v880 = vadd.f32 %v796, %v877
        %v884 = vunpack.c.l.s4 1983009808
        %v885 = vunpack.c.0.s8 %v884
        %v886 = vlaneseq
        %v887 = vshrl.u32 %v886, 7
        %v888 = vsub.s32 %v885, %v887
        %v889 = vrot.slane %v226, %v888
        %v891 = vunpack.c.l.s4 1983009808
        %v892 = vunpack.c.0.s8 %v891
        %v893 = vlaneseq
        %v894 = vshrl.u32 %v893, 7
        %v895 = vsub.s32 %v892, %v894
        %v896 = vrot.slane %v228, %v895
        %v897 = vrot.slane %v708, 2
        %v898 = vrot.slane %v889, 7
        %v899 = vsel %vm338, %v897, %v898
        %v900 = vrot.slane %v711, 2
        %v901 = vrot.slane %v896, 7
        %v902 = vsel %vm338, %v900, %v901
        %s903 = scalar_lea.vmem %s213, 112
        %v904 = vld [vmem:[%s903] sm:$0xff]
        %v905 = vld [vmem:[%s903 + $0x8] sm:$0xff]
        %v906 = vcombine.low %v899, %v902
        %v908 = vunpack.c.l.s4 1983009808
        %v909 = vunpack.c.0.s8 %v908
        %v910 = vlaneseq
        %v911 = vshrl.u32 %v910, 7
        %v912 = vsub.s32 %v909, %v911
        %v913 = vrot.slane %v906, %v912
        %v914 = vsel %vm242, %v913, 0
        %916 = vmatprep.subr.mxu0 0.0
        %917 = vmatpush1.msra.mxu0 %v904
        %918 = vmatprep.subr.mxu0 0.0
        %919 = vmatpush1.msra.mxu0 %v905
        %920 = vmatprep.subr.mxu0 0.0
        %921 = vmatpush1.msra.mxu0 0.0
        %922 = vmatprep.subr.mxu0 0.0
        %923 = vmatpush1.msra.mxu0 0.0
        %924 = vmatprep.subr.mxu0 0.0
        %925 = vmatpush1.msra.mxu0 0.0
        %926 = vmatprep.subr.mxu0 0.0
        %927 = vmatpush1.msra.mxu0 0.0
        %928 = vmatprep.subr.mxu0 0.0
        %929 = vmatpush1.msra.mxu0 0.0
        %930 = vmatprep.subr.mxu0 0.0
        %931 = vmatpush1.msra.mxu0 0.0
        %932 = vmatprep.subr.mxu0 0.0
        %933 = vmatpush1.msra.mxu0 0.0
        %934 = vmatprep.subr.mxu0 0.0
        %935 = vmatpush1.msra.mxu0 0.0
        %936 = vmatprep.subr.mxu0 0.0
        %937 = vmatpush1.msra.mxu0 0.0
        %938 = vmatprep.subr.mxu0 0.0
        %939 = vmatpush1.msra.mxu0 0.0
        %940 = vmatprep.subr.mxu0 0.0
        %941 = vmatpush1.msra.mxu0 0.0
        %942 = vmatprep.subr.mxu0 0.0
        %943 = vmatpush1.msra.mxu0 0.0
        %944 = vmatprep.subr.mxu0 0.0
        %945 = vmatpush1.msra.mxu0 0.0
        %946 = vmatprep.subr.mxu0 0.0
        %947 = vmatpush1.msra.mxu0 0.0
        %948 = vmatprep.subr.mxu0 0.0
        %949 = vmatpush1.msra.mxu0 0.0
        %950 = vmatprep.subr.mxu0 0.0
        %951 = vmatpush1.msra.mxu0 0.0
        %952 = vmatprep.subr.mxu0 0.0
        %953 = vmatpush1.msra.mxu0 0.0
        %954 = vmatprep.subr.mxu0 0.0
        %955 = vmatpush1.msra.mxu0 0.0
        %956 = vmatprep.subr.mxu0 0.0
        %957 = vmatpush1.msra.mxu0 0.0
        %958 = vmatprep.subr.mxu0 0.0
        %959 = vmatpush1.msra.mxu0 0.0
        %960 = vmatprep.subr.mxu0 0.0
        %961 = vmatpush1.msra.mxu0 0.0
        %962 = vmatprep.subr.mxu0 0.0
        %963 = vmatpush1.msra.mxu0 0.0
        %964 = vmatprep.subr.mxu0 0.0
        %965 = vmatpush1.msra.mxu0 0.0
        %966 = vmatprep.subr.mxu0 0.0
        %967 = vmatpush1.msra.mxu0 0.0
        %968 = vmatprep.subr.mxu0 0.0
        %969 = vmatpush1.msra.mxu0 0.0
        %970 = vmatprep.subr.mxu0 0.0
        %971 = vmatpush1.msra.mxu0 0.0
        %972 = vmatprep.subr.mxu0 0.0
        %973 = vmatpush1.msra.mxu0 0.0
        %974 = vmatprep.subr.mxu0 0.0
        %975 = vmatpush1.msra.mxu0 0.0
        %976 = vmatprep.subr.mxu0 0.0
        %977 = vmatpush1.msra.mxu0 0.0
        %978 = vmatprep.subr.mxu0 0.0
        %979 = vmatpush1.msra.mxu0 0.0
        %980 = vmatprep.mubr.f32.mxu0 0.0
        %981 = vmatmul.mubr.f32.gmra.mrb[0].mxu0 %v914
        %v982 = vpop.f32.mrb[0].mxu0
        %v983 = vadd.f32 0.0, %v982
        %v984 = vpop.f32.mrb[0].mxu0
        %985 = vdwg.mxu0
        %v986 = vadd.f32 %v880, %v983
        %s987 = scalar_lea.vmem %s213, 128
        %v988 = vld [vmem:[%s987] sm:$0xff]
        %v989 = vld [vmem:[%s987 + $0x8] sm:$0xff]
        %v990 = vcombine.low %v226, %v228
        %v992 = vunpack.c.l.s4 1983009808
        %v993 = vunpack.c.0.s8 %v992
        %v994 = vlaneseq
        %v995 = vshrl.u32 %v994, 7
        %v996 = vsub.s32 %v993, %v995
        %v997 = vrot.slane %v990, %v996
        %v998 = vsel %vm242, %v997, 0
        %1000 = vmatprep.subr.mxu0 0.0
        %1001 = vmatpush1.msra.mxu0 %v988
        %1002 = vmatprep.subr.mxu0 0.0
        %1003 = vmatpush1.msra.mxu0 %v989
        %1004 = vmatprep.subr.mxu0 0.0
        %1005 = vmatpush1.msra.mxu0 0.0
        %1006 = vmatprep.subr.mxu0 0.0
        %1007 = vmatpush1.msra.mxu0 0.0
        %1008 = vmatprep.subr.mxu0 0.0
        %1009 = vmatpush1.msra.mxu0 0.0
        %1010 = vmatprep.subr.mxu0 0.0
        %1011 = vmatpush1.msra.mxu0 0.0
        %1012 = vmatprep.subr.mxu0 0.0
        %1013 = vmatpush1.msra.mxu0 0.0
        %1014 = vmatprep.subr.mxu0 0.0
        %1015 = vmatpush1.msra.mxu0 0.0
        %1016 = vmatprep.subr.mxu0 0.0
        %1017 = vmatpush1.msra.mxu0 0.0
        %1018 = vmatprep.subr.mxu0 0.0
        %1019 = vmatpush1.msra.mxu0 0.0
        %1020 = vmatprep.subr.mxu0 0.0
        %1021 = vmatpush1.msra.mxu0 0.0
        %1022 = vmatprep.subr.mxu0 0.0
        %1023 = vmatpush1.msra.mxu0 0.0
        %1024 = vmatprep.subr.mxu0 0.0
        %1025 = vmatpush1.msra.mxu0 0.0
        %1026 = vmatprep.subr.mxu0 0.0
        %1027 = vmatpush1.msra.mxu0 0.0
        %1028 = vmatprep.subr.mxu0 0.0
        %1029 = vmatpush1.msra.mxu0 0.0
        %1030 = vmatprep.subr.mxu0 0.0
        %1031 = vmatpush1.msra.mxu0 0.0
        %1032 = vmatprep.subr.mxu0 0.0
        %1033 = vmatpush1.msra.mxu0 0.0
        %1034 = vmatprep.subr.mxu0 0.0
        %1035 = vmatpush1.msra.mxu0 0.0
        %1036 = vmatprep.subr.mxu0 0.0
        %1037 = vmatpush1.msra.mxu0 0.0
        %1038 = vmatprep.subr.mxu0 0.0
        %1039 = vmatpush1.msra.mxu0 0.0
        %1040 = vmatprep.subr.mxu0 0.0
        %1041 = vmatpush1.msra.mxu0 0.0
        %1042 = vmatprep.subr.mxu0 0.0
        %1043 = vmatpush1.msra.mxu0 0.0
        %1044 = vmatprep.subr.mxu0 0.0
        %1045 = vmatpush1.msra.mxu0 0.0
        %1046 = vmatprep.subr.mxu0 0.0
        %1047 = vmatpush1.msra.mxu0 0.0
        %1048 = vmatprep.subr.mxu0 0.0
        %1049 = vmatpush1.msra.mxu0 0.0
        %1050 = vmatprep.subr.mxu0 0.0
        %1051 = vmatpush1.msra.mxu0 0.0
        %1052 = vmatprep.subr.mxu0 0.0
        %1053 = vmatpush1.msra.mxu0 0.0
        %1054 = vmatprep.subr.mxu0 0.0
        %1055 = vmatpush1.msra.mxu0 0.0
        %1056 = vmatprep.subr.mxu0 0.0
        %1057 = vmatpush1.msra.mxu0 0.0
        %1058 = vmatprep.subr.mxu0 0.0
        %1059 = vmatpush1.msra.mxu0 0.0
        %1060 = vmatprep.subr.mxu0 0.0
        %1061 = vmatpush1.msra.mxu0 0.0
        %1062 = vmatprep.subr.mxu0 0.0
        %1063 = vmatpush1.msra.mxu0 0.0
        %1064 = vmatprep.mubr.f32.mxu0 0.0
        %1065 = vmatmul.mubr.f32.gmra.mrb[0].mxu0 %v998
        %v1066 = vpop.f32.mrb[0].mxu0
        %v1067 = vadd.f32 0.0, %v1066
        %v1068 = vpop.f32.mrb[0].mxu0
        %1069 = vdwg.mxu0
        %v1070 = vadd.f32 %v986, %v1067
        %v1071 = vcombine.high %v889, %v889
        %v1072 = vcombine.high %v896, %v896
        %v1073 = vrot.slane %v898, 2
        %v1074 = vrot.slane %v1071, 7
        %v1075 = vsel %vm338, %v1073, %v1074
        %v1076 = vrot.slane %v901, 2
        %v1077 = vrot.slane %v1072, 7
        %v1078 = vsel %vm338, %v1076, %v1077
        %s1079 = scalar_lea.vmem %s213, 144
        %v1080 = vld [vmem:[%s1079] sm:$0xff]
        %v1081 = vld [vmem:[%s1079 + $0x8] sm:$0xff]
        %v1082 = vcombine.low %v1075, %v1078
        %v1084 = vunpack.c.l.s4 1983009808
        %v1085 = vunpack.c.0.s8 %v1084
        %v1086 = vlaneseq
        %v1087 = vshrl.u32 %v1086, 7
        %v1088 = vsub.s32 %v1085, %v1087
        %v1089 = vrot.slane %v1082, %v1088
        %v1090 = vsel %vm242, %v1089, 0
        %1092 = vmatprep.subr.mxu0 0.0
        %1093 = vmatpush1.msra.mxu0 %v1080
        %1094 = vmatprep.subr.mxu0 0.0
        %1095 = vmatpush1.msra.mxu0 %v1081
        %1096 = vmatprep.subr.mxu0 0.0
        %1097 = vmatpush1.msra.mxu0 0.0
        %1098 = vmatprep.subr.mxu0 0.0
        %1099 = vmatpush1.msra.mxu0 0.0
        %1100 = vmatprep.subr.mxu0 0.0
        %1101 = vmatpush1.msra.mxu0 0.0
        %1102 = vmatprep.subr.mxu0 0.0
        %1103 = vmatpush1.msra.mxu0 0.0
        %1104 = vmatprep.subr.mxu0 0.0
        %1105 = vmatpush1.msra.mxu0 0.0
        %1106 = vmatprep.subr.mxu0 0.0
        %1107 = vmatpush1.msra.mxu0 0.0
        %1108 = vmatprep.subr.mxu0 0.0
        %1109 = vmatpush1.msra.mxu0 0.0
        %1110 = vmatprep.subr.mxu0 0.0
        %1111 = vmatpush1.msra.mxu0 0.0
        %1112 = vmatprep.subr.mxu0 0.0
        %1113 = vmatpush1.msra.mxu0 0.0
        %1114 = vmatprep.subr.mxu0 0.0
        %1115 = vmatpush1.msra.mxu0 0.0
        %1116 = vmatprep.subr.mxu0 0.0
        %1117 = vmatpush1.msra.mxu0 0.0
        %1118 = vmatprep.subr.mxu0 0.0
        %1119 = vmatpush1.msra.mxu0 0.0
        %1120 = vmatprep.subr.mxu0 0.0
        %1121 = vmatpush1.msra.mxu0 0.0
        %1122 = vmatprep.subr.mxu0 0.0
        %1123 = vmatpush1.msra.mxu0 0.0
        %1124 = vmatprep.subr.mxu0 0.0
        %1125 = vmatpush1.msra.mxu0 0.0
        %1126 = vmatprep.subr.mxu0 0.0
        %1127 = vmatpush1.msra.mxu0 0.0
        %1128 = vmatprep.subr.mxu0 0.0
        %1129 = vmatpush1.msra.mxu0 0.0
        %1130 = vmatprep.subr.mxu0 0.0
        %1131 = vmatpush1.msra.mxu0 0.0
        %1132 = vmatprep.subr.mxu0 0.0
        %1133 = vmatpush1.msra.mxu0 0.0
        %1134 = vmatprep.subr.mxu0 0.0
        %1135 = vmatpush1.msra.mxu0 0.0
        %1136 = vmatprep.subr.mxu0 0.0
        %1137 = vmatpush1.msra.mxu0 0.0
        %1138 = vmatprep.subr.mxu0 0.0
        %1139 = vmatpush1.msra.mxu0 0.0
        %1140 = vmatprep.subr.mxu0 0.0
        %1141 = vmatpush1.msra.mxu0 0.0
        %1142 = vmatprep.subr.mxu0 0.0
        %1143 = vmatpush1.msra.mxu0 0.0
        %1144 = vmatprep.subr.mxu0 0.0
        %1145 = vmatpush1.msra.mxu0 0.0
        %1146 = vmatprep.subr.mxu0 0.0
        %1147 = vmatpush1.msra.mxu0 0.0
        %1148 = vmatprep.subr.mxu0 0.0
        %1149 = vmatpush1.msra.mxu0 0.0
        %1150 = vmatprep.subr.mxu0 0.0
        %1151 = vmatpush1.msra.mxu0 0.0
        %1152 = vmatprep.subr.mxu0 0.0
        %1153 = vmatpush1.msra.mxu0 0.0
        %1154 = vmatprep.subr.mxu0 0.0
        %1155 = vmatpush1.msra.mxu0 0.0
        %1156 = vmatprep.mubr.f32.mxu0 0.0
        %1157 = vmatmul.mubr.f32.gmra.mrb[0].mxu0 %v1090
        %v1158 = vpop.f32.mrb[0].mxu0
        %v1159 = vadd.f32 0.0, %v1158
        %v1160 = vpop.f32.mrb[0].mxu0
        %1161 = vdwg.mxu0
        %v1162 = vadd.f32 %v1070, %v1159
        %s1163 = scalar_lea.vmem %s213, 160
        %v1164 = vld [vmem:[%s1163] sm:$0xff]
        %v1165 = vld [vmem:[%s1163 + $0x8] sm:$0xff]
        %v1166 = vcombine.low %v1071, %v1072
        %v1168 = vunpack.c.l.s4 1983009808
        %v1169 = vunpack.c.0.s8 %v1168
        %v1170 = vlaneseq
        %v1171 = vshrl.u32 %v1170, 7
        %v1172 = vsub.s32 %v1169, %v1171
        %v1173 = vrot.slane %v1166, %v1172
        %v1174 = vsel %vm242, %v1173, 0
        %1176 = vmatprep.subr.mxu0 0.0
        %1177 = vmatpush1.msra.mxu0 %v1164
        %1178 = vmatprep.subr.mxu0 0.0
        %1179 = vmatpush1.msra.mxu0 %v1165
        %1180 = vmatprep.subr.mxu0 0.0
        %1181 = vmatpush1.msra.mxu0 0.0
        %1182 = vmatprep.subr.mxu0 0.0
        %1183 = vmatpush1.msra.mxu0 0.0
        %1184 = vmatprep.subr.mxu0 0.0
        %1185 = vmatpush1.msra.mxu0 0.0
        %1186 = vmatprep.subr.mxu0 0.0
        %1187 = vmatpush1.msra.mxu0 0.0
        %1188 = vmatprep.subr.mxu0 0.0
        %1189 = vmatpush1.msra.mxu0 0.0
        %1190 = vmatprep.subr.mxu0 0.0
        %1191 = vmatpush1.msra.mxu0 0.0
        %1192 = vmatprep.subr.mxu0 0.0
        %1193 = vmatpush1.msra.mxu0 0.0
        %1194 = vmatprep.subr.mxu0 0.0
        %1195 = vmatpush1.msra.mxu0 0.0
        %1196 = vmatprep.subr.mxu0 0.0
        %1197 = vmatpush1.msra.mxu0 0.0
        %1198 = vmatprep.subr.mxu0 0.0
        %1199 = vmatpush1.msra.mxu0 0.0
        %1200 = vmatprep.subr.mxu0 0.0
        %1201 = vmatpush1.msra.mxu0 0.0
        %1202 = vmatprep.subr.mxu0 0.0
        %1203 = vmatpush1.msra.mxu0 0.0
        %1204 = vmatprep.subr.mxu0 0.0
        %1205 = vmatpush1.msra.mxu0 0.0
        %1206 = vmatprep.subr.mxu0 0.0
        %1207 = vmatpush1.msra.mxu0 0.0
        %1208 = vmatprep.subr.mxu0 0.0
        %1209 = vmatpush1.msra.mxu0 0.0
        %1210 = vmatprep.subr.mxu0 0.0
        %1211 = vmatpush1.msra.mxu0 0.0
        %1212 = vmatprep.subr.mxu0 0.0
        %1213 = vmatpush1.msra.mxu0 0.0
        %1214 = vmatprep.subr.mxu0 0.0
        %1215 = vmatpush1.msra.mxu0 0.0
        %1216 = vmatprep.subr.mxu0 0.0
        %1217 = vmatpush1.msra.mxu0 0.0
        %1218 = vmatprep.subr.mxu0 0.0
        %1219 = vmatpush1.msra.mxu0 0.0
        %1220 = vmatprep.subr.mxu0 0.0
        %1221 = vmatpush1.msra.mxu0 0.0
        %1222 = vmatprep.subr.mxu0 0.0
        %1223 = vmatpush1.msra.mxu0 0.0
        %1224 = vmatprep.subr.mxu0 0.0
        %1225 = vmatpush1.msra.mxu0 0.0
        %1226 = vmatprep.subr.mxu0 0.0
        %1227 = vmatpush1.msra.mxu0 0.0
        %1228 = vmatprep.subr.mxu0 0.0
        %1229 = vmatpush1.msra.mxu0 0.0
        %1230 = vmatprep.subr.mxu0 0.0
        %1231 = vmatpush1.msra.mxu0 0.0
        %1232 = vmatprep.subr.mxu0 0.0
        %1233 = vmatpush1.msra.mxu0 0.0
        %1234 = vmatprep.subr.mxu0 0.0
        %1235 = vmatpush1.msra.mxu0 0.0
        %1236 = vmatprep.subr.mxu0 0.0
        %1237 = vmatpush1.msra.mxu0 0.0
        %1238 = vmatprep.subr.mxu0 0.0
        %1239 = vmatpush1.msra.mxu0 0.0
        %1240 = vmatprep.mubr.f32.mxu0 0.0
        %1241 = vmatmul.mubr.f32.gmra.mrb[0].mxu0 %v1174
        %v1242 = vpop.f32.mrb[0].mxu0
        %v1243 = vadd.f32 0.0, %v1242
        %v1244 = vpop.f32.mrb[0].mxu0
        %1245 = vdwg.mxu0
        %v1246 = vadd.f32 %v1162, %v1243
        %v1247 = vcombine.high %v226, %v226
        %v1249 = vunpack.c.l.s4 1983009808
        %v1250 = vunpack.c.0.s8 %v1249
        %v1251 = vlaneseq
        %v1252 = vshrl.u32 %v1251, 7
        %v1253 = vsub.s32 %v1250, %v1252
        %v1254 = vrot.slane %v1247, %v1253
        %v1255 = vcombine.high %v228, %v228
        %v1257 = vunpack.c.l.s4 1983009808
        %v1258 = vunpack.c.0.s8 %v1257
        %v1259 = vlaneseq
        %v1260 = vshrl.u32 %v1259, 7
        %v1261 = vsub.s32 %v1258, %v1260
        %v1262 = vrot.slane %v1255, %v1261
        %v1263 = vrot.slane %v1074, 2
        %v1264 = vrot.slane %v1254, 7
        %v1265 = vsel %vm338, %v1263, %v1264
        %v1266 = vrot.slane %v1077, 2
        %v1267 = vrot.slane %v1262, 7
        %v1268 = vsel %vm338, %v1266, %v1267
        %s1269 = scalar_lea.vmem %s213, 176
        %v1270 = vld [vmem:[%s1269] sm:$0xff]
        %v1271 = vld [vmem:[%s1269 + $0x8] sm:$0xff]
        %v1272 = vcombine.low %v1265, %v1268
        %v1274 = vunpack.c.l.s4 1983009808
        %v1275 = vunpack.c.0.s8 %v1274
        %v1276 = vlaneseq
        %v1277 = vshrl.u32 %v1276, 7
        %v1278 = vsub.s32 %v1275, %v1277
        %v1279 = vrot.slane %v1272, %v1278
        %v1280 = vsel %vm242, %v1279, 0
        %1282 = vmatprep.subr.mxu0 0.0
        %1283 = vmatpush1.msra.mxu0 %v1270
        %1284 = vmatprep.subr.mxu0 0.0
        %1285 = vmatpush1.msra.mxu0 %v1271
        %1286 = vmatprep.subr.mxu0 0.0
        %1287 = vmatpush1.msra.mxu0 0.0
        %1288 = vmatprep.subr.mxu0 0.0
        %1289 = vmatpush1.msra.mxu0 0.0
        %1290 = vmatprep.subr.mxu0 0.0
        %1291 = vmatpush1.msra.mxu0 0.0
        %1292 = vmatprep.subr.mxu0 0.0
        %1293 = vmatpush1.msra.mxu0 0.0
        %1294 = vmatprep.subr.mxu0 0.0
        %1295 = vmatpush1.msra.mxu0 0.0
        %1296 = vmatprep.subr.mxu0 0.0
        %1297 = vmatpush1.msra.mxu0 0.0
        %1298 = vmatprep.subr.mxu0 0.0
        %1299 = vmatpush1.msra.mxu0 0.0
        %1300 = vmatprep.subr.mxu0 0.0
        %1301 = vmatpush1.msra.mxu0 0.0
        %1302 = vmatprep.subr.mxu0 0.0
        %1303 = vmatpush1.msra.mxu0 0.0
        %1304 = vmatprep.subr.mxu0 0.0
        %1305 = vmatpush1.msra.mxu0 0.0
        %1306 = vmatprep.subr.mxu0 0.0
        %1307 = vmatpush1.msra.mxu0 0.0
        %1308 = vmatprep.subr.mxu0 0.0
        %1309 = vmatpush1.msra.mxu0 0.0
        %1310 = vmatprep.subr.mxu0 0.0
        %1311 = vmatpush1.msra.mxu0 0.0
        %1312 = vmatprep.subr.mxu0 0.0
        %1313 = vmatpush1.msra.mxu0 0.0
        %1314 = vmatprep.subr.mxu0 0.0
        %1315 = vmatpush1.msra.mxu0 0.0
        %1316 = vmatprep.subr.mxu0 0.0
        %1317 = vmatpush1.msra.mxu0 0.0
        %1318 = vmatprep.subr.mxu0 0.0
        %1319 = vmatpush1.msra.mxu0 0.0
        %1320 = vmatprep.subr.mxu0 0.0
        %1321 = vmatpush1.msra.mxu0 0.0
        %1322 = vmatprep.subr.mxu0 0.0
        %1323 = vmatpush1.msra.mxu0 0.0
        %1324 = vmatprep.subr.mxu0 0.0
        %1325 = vmatpush1.msra.mxu0 0.0
        %1326 = vmatprep.subr.mxu0 0.0
        %1327 = vmatpush1.msra.mxu0 0.0
        %1328 = vmatprep.subr.mxu0 0.0
        %1329 = vmatpush1.msra.mxu0 0.0
        %1330 = vmatprep.subr.mxu0 0.0
        %1331 = vmatpush1.msra.mxu0 0.0
        %1332 = vmatprep.subr.mxu0 0.0
        %1333 = vmatpush1.msra.mxu0 0.0
        %1334 = vmatprep.subr.mxu0 0.0
        %1335 = vmatpush1.msra.mxu0 0.0
        %1336 = vmatprep.subr.mxu0 0.0
        %1337 = vmatpush1.msra.mxu0 0.0
        %1338 = vmatprep.subr.mxu0 0.0
        %1339 = vmatpush1.msra.mxu0 0.0
        %1340 = vmatprep.subr.mxu0 0.0
        %1341 = vmatpush1.msra.mxu0 0.0
        %1342 = vmatprep.subr.mxu0 0.0
        %1343 = vmatpush1.msra.mxu0 0.0
        %1344 = vmatprep.subr.mxu0 0.0
        %1345 = vmatpush1.msra.mxu0 0.0
        %1346 = vmatprep.mubr.f32.mxu0 0.0
        %1347 = vmatmul.mubr.f32.gmra.mrb[0].mxu0 %v1280
        %v1348 = vpop.f32.mrb[0].mxu0
        %v1349 = vadd.f32 0.0, %v1348
        %v1350 = vpop.f32.mrb[0].mxu0
        %1351 = vdwg.mxu0
        %v1352 = vadd.f32 %v1246, %v1349
        %s1353 = scalar_lea.vmem %s213, 192
        %v1354 = vld [vmem:[%s1353] sm:$0xff]
        %v1355 = vld [vmem:[%s1353 + $0x8] sm:$0xff]
        %v1356 = vcombine.low %v1254, %v1262
        %v1358 = vunpack.c.l.s4 1983009808
        %v1359 = vunpack.c.0.s8 %v1358
        %v1360 = vlaneseq
        %v1361 = vshrl.u32 %v1360, 7
        %v1362 = vsub.s32 %v1359, %v1361
        %v1363 = vrot.slane %v1356, %v1362
        %v1364 = vsel %vm242, %v1363, 0
        %1366 = vmatprep.subr.mxu0 0.0
        %1367 = vmatpush1.msra.mxu0 %v1354
        %1368 = vmatprep.subr.mxu0 0.0
        %1369 = vmatpush1.msra.mxu0 %v1355
        %1370 = vmatprep.subr.mxu0 0.0
        %1371 = vmatpush1.msra.mxu0 0.0
        %1372 = vmatprep.subr.mxu0 0.0
        %1373 = vmatpush1.msra.mxu0 0.0
        %1374 = vmatprep.subr.mxu0 0.0
        %1375 = vmatpush1.msra.mxu0 0.0
        %1376 = vmatprep.subr.mxu0 0.0
        %1377 = vmatpush1.msra.mxu0 0.0
        %1378 = vmatprep.subr.mxu0 0.0
        %1379 = vmatpush1.msra.mxu0 0.0
        %1380 = vmatprep.subr.mxu0 0.0
        %1381 = vmatpush1.msra.mxu0 0.0
        %1382 = vmatprep.subr.mxu0 0.0
        %1383 = vmatpush1.msra.mxu0 0.0
        %1384 = vmatprep.subr.mxu0 0.0
        %1385 = vmatpush1.msra.mxu0 0.0
        %1386 = vmatprep.subr.mxu0 0.0
        %1387 = vmatpush1.msra.mxu0 0.0
        %1388 = vmatprep.subr.mxu0 0.0
        %1389 = vmatpush1.msra.mxu0 0.0
        %1390 = vmatprep.subr.mxu0 0.0
        %1391 = vmatpush1.msra.mxu0 0.0
        %1392 = vmatprep.subr.mxu0 0.0
        %1393 = vmatpush1.msra.mxu0 0.0
        %1394 = vmatprep.subr.mxu0 0.0
        %1395 = vmatpush1.msra.mxu0 0.0
        %1396 = vmatprep.subr.mxu0 0.0
        %1397 = vmatpush1.msra.mxu0 0.0
        %1398 = vmatprep.subr.mxu0 0.0
        %1399 = vmatpush1.msra.mxu0 0.0
        %1400 = vmatprep.subr.mxu0 0.0
        %1401 = vmatpush1.msra.mxu0 0.0
        %1402 = vmatprep.subr.mxu0 0.0
        %1403 = vmatpush1.msra.mxu0 0.0
        %1404 = vmatprep.subr.mxu0 0.0
        %1405 = vmatpush1.msra.mxu0 0.0
        %1406 = vmatprep.subr.mxu0 0.0
        %1407 = vmatpush1.msra.mxu0 0.0
        %1408 = vmatprep.subr.mxu0 0.0
        %1409 = vmatpush1.msra.mxu0 0.0
        %1410 = vmatprep.subr.mxu0 0.0
        %1411 = vmatpush1.msra.mxu0 0.0
        %1412 = vmatprep.subr.mxu0 0.0
        %1413 = vmatpush1.msra.mxu0 0.0
        %1414 = vmatprep.subr.mxu0 0.0
        %1415 = vmatpush1.msra.mxu0 0.0
        %1416 = vmatprep.subr.mxu0 0.0
        %1417 = vmatpush1.msra.mxu0 0.0
        %1418 = vmatprep.subr.mxu0 0.0
        %1419 = vmatpush1.msra.mxu0 0.0
        %1420 = vmatprep.subr.mxu0 0.0
        %1421 = vmatpush1.msra.mxu0 0.0
        %1422 = vmatprep.subr.mxu0 0.0
        %1423 = vmatpush1.msra.mxu0 0.0
        %1424 = vmatprep.subr.mxu0 0.0
        %1425 = vmatpush1.msra.mxu0 0.0
        %1426 = vmatprep.subr.mxu0 0.0
        %1427 = vmatpush1.msra.mxu0 0.0
        %1428 = vmatprep.subr.mxu0 0.0
        %1429 = vmatpush1.msra.mxu0 0.0
        %1430 = vmatprep.mubr.f32.mxu0 0.0
        %1431 = vmatmul.mubr.f32.gmra.mrb[0].mxu0 %v1364
        %v1432 = vpop.f32.mrb[0].mxu0
        %v1433 = vadd.f32 0.0, %v1432
        %v1434 = vpop.f32.mrb[0].mxu0
        %1435 = vdwg.mxu0
        %v1436 = vadd.f32 %v1352, %v1433
        %v1437 = vcombine.high %v1254, %v1254
        %v1438 = vcombine.high %v1262, %v1262
        %v1439 = vrot.slane %v1264, 2
        %v1440 = vrot.slane %v1437, 7
        %v1441 = vsel %vm338, %v1439, %v1440
        %v1442 = vrot.slane %v1267, 2
        %v1443 = vrot.slane %v1438, 7
        %v1444 = vsel %vm338, %v1442, %v1443
        %s1445 = scalar_lea.vmem %s213, 208
        %v1446 = vld [vmem:[%s1445] sm:$0xff]
        %v1447 = vld [vmem:[%s1445 + $0x8] sm:$0xff]
        %v1448 = vcombine.low %v1441, %v1444
        %v1450 = vunpack.c.l.s4 1983009808
        %v1451 = vunpack.c.0.s8 %v1450
        %v1452 = vlaneseq
        %v1453 = vshrl.u32 %v1452, 7
        %v1454 = vsub.s32 %v1451, %v1453
        %v1455 = vrot.slane %v1448, %v1454
        %v1456 = vsel %vm242, %v1455, 0
        %1458 = vmatprep.subr.mxu0 0.0
        %1459 = vmatpush1.msra.mxu0 %v1446
        %1460 = vmatprep.subr.mxu0 0.0
        %1461 = vmatpush1.msra.mxu0 %v1447
        %1462 = vmatprep.subr.mxu0 0.0
        %1463 = vmatpush1.msra.mxu0 0.0
        %1464 = vmatprep.subr.mxu0 0.0
        %1465 = vmatpush1.msra.mxu0 0.0
        %1466 = vmatprep.subr.mxu0 0.0
        %1467 = vmatpush1.msra.mxu0 0.0
        %1468 = vmatprep.subr.mxu0 0.0
        %1469 = vmatpush1.msra.mxu0 0.0
        %1470 = vmatprep.subr.mxu0 0.0
        %1471 = vmatpush1.msra.mxu0 0.0
        %1472 = vmatprep.subr.mxu0 0.0
        %1473 = vmatpush1.msra.mxu0 0.0
        %1474 = vmatprep.subr.mxu0 0.0
        %1475 = vmatpush1.msra.mxu0 0.0
        %1476 = vmatprep.subr.mxu0 0.0
        %1477 = vmatpush1.msra.mxu0 0.0
        %1478 = vmatprep.subr.mxu0 0.0
        %1479 = vmatpush1.msra.mxu0 0.0
        %1480 = vmatprep.subr.mxu0 0.0
        %1481 = vmatpush1.msra.mxu0 0.0
        %1482 = vmatprep.subr.mxu0 0.0
        %1483 = vmatpush1.msra.mxu0 0.0
        %1484 = vmatprep.subr.mxu0 0.0
        %1485 = vmatpush1.msra.mxu0 0.0
        %1486 = vmatprep.subr.mxu0 0.0
        %1487 = vmatpush1.msra.mxu0 0.0
        %1488 = vmatprep.subr.mxu0 0.0
        %1489 = vmatpush1.msra.mxu0 0.0
        %1490 = vmatprep.subr.mxu0 0.0
        %1491 = vmatpush1.msra.mxu0 0.0
        %1492 = vmatprep.subr.mxu0 0.0
        %1493 = vmatpush1.msra.mxu0 0.0
        %1494 = vmatprep.subr.mxu0 0.0
        %1495 = vmatpush1.msra.mxu0 0.0
        %1496 = vmatprep.subr.mxu0 0.0
        %1497 = vmatpush1.msra.mxu0 0.0
        %1498 = vmatprep.subr.mxu0 0.0
        %1499 = vmatpush1.msra.mxu0 0.0
        %1500 = vmatprep.subr.mxu0 0.0
        %1501 = vmatpush1.msra.mxu0 0.0
        %1502 = vmatprep.subr.mxu0 0.0
        %1503 = vmatpush1.msra.mxu0 0.0
        %1504 = vmatprep.subr.mxu0 0.0
        %1505 = vmatpush1.msra.mxu0 0.0
        %1506 = vmatprep.subr.mxu0 0.0
        %1507 = vmatpush1.msra.mxu0 0.0
        %1508 = vmatprep.subr.mxu0 0.0
        %1509 = vmatpush1.msra.mxu0 0.0
        %1510 = vmatprep.subr.mxu0 0.0
        %1511 = vmatpush1.msra.mxu0 0.0
        %1512 = vmatprep.subr.mxu0 0.0
        %1513 = vmatpush1.msra.mxu0 0.0
        %1514 = vmatprep.subr.mxu0 0.0
        %1515 = vmatpush1.msra.mxu0 0.0
        %1516 = vmatprep.subr.mxu0 0.0
        %1517 = vmatpush1.msra.mxu0 0.0
        %1518 = vmatprep.subr.mxu0 0.0
        %1519 = vmatpush1.msra.mxu0 0.0
        %1520 = vmatprep.subr.mxu0 0.0
        %1521 = vmatpush1.msra.mxu0 0.0
        %1522 = vmatprep.mubr.f32.mxu0 0.0
        %1523 = vmatmul.mubr.f32.gmra.mrb[0].mxu0 %v1456
        %v1524 = vpop.f32.mrb[0].mxu0
        %v1525 = vadd.f32 0.0, %v1524
        %v1526 = vpop.f32.mrb[0].mxu0
        %1527 = vdwg.mxu0
        %v1528 = vadd.f32 %v1436, %v1525
        %s1529 = scalar_lea.vmem %s213, 224
        %v1530 = vld [vmem:[%s1529] sm:$0xff]
        %v1531 = vld [vmem:[%s1529 + $0x8] sm:$0xff]
        %v1532 = vcombine.low %v1437, %v1438
        %v1534 = vunpack.c.l.s4 1983009808
        %v1535 = vunpack.c.0.s8 %v1534
        %v1536 = vlaneseq
        %v1537 = vshrl.u32 %v1536, 7
        %v1538 = vsub.s32 %v1535, %v1537
        %v1539 = vrot.slane %v1532, %v1538
        %v1540 = vsel %vm242, %v1539, 0
        %1542 = vmatprep.subr.mxu0 0.0
        %1543 = vmatpush1.msra.mxu0 %v1530
        %1544 = vmatprep.subr.mxu0 0.0
        %1545 = vmatpush1.msra.mxu0 %v1531
        %1546 = vmatprep.subr.mxu0 0.0
        %1547 = vmatpush1.msra.mxu0 0.0
        %1548 = vmatprep.subr.mxu0 0.0
        %1549 = vmatpush1.msra.mxu0 0.0
        %1550 = vmatprep.subr.mxu0 0.0
        %1551 = vmatpush1.msra.mxu0 0.0
        %1552 = vmatprep.subr.mxu0 0.0
        %1553 = vmatpush1.msra.mxu0 0.0
        %1554 = vmatprep.subr.mxu0 0.0
        %1555 = vmatpush1.msra.mxu0 0.0
        %1556 = vmatprep.subr.mxu0 0.0
        %1557 = vmatpush1.msra.mxu0 0.0
        %1558 = vmatprep.subr.mxu0 0.0
        %1559 = vmatpush1.msra.mxu0 0.0
        %1560 = vmatprep.subr.mxu0 0.0
        %1561 = vmatpush1.msra.mxu0 0.0
        %1562 = vmatprep.subr.mxu0 0.0
        %1563 = vmatpush1.msra.mxu0 0.0
        %1564 = vmatprep.subr.mxu0 0.0
        %1565 = vmatpush1.msra.mxu0 0.0
        %1566 = vmatprep.subr.mxu0 0.0
        %1567 = vmatpush1.msra.mxu0 0.0
        %1568 = vmatprep.subr.mxu0 0.0
        %1569 = vmatpush1.msra.mxu0 0.0
        %1570 = vmatprep.subr.mxu0 0.0
        %1571 = vmatpush1.msra.mxu0 0.0
        %1572 = vmatprep.subr.mxu0 0.0
        %1573 = vmatpush1.msra.mxu0 0.0
        %1574 = vmatprep.subr.mxu0 0.0
        %1575 = vmatpush1.msra.mxu0 0.0
        %1576 = vmatprep.subr.mxu0 0.0
        %1577 = vmatpush1.msra.mxu0 0.0
        %1578 = vmatprep.subr.mxu0 0.0
        %1579 = vmatpush1.msra.mxu0 0.0
        %1580 = vmatprep.subr.mxu0 0.0
        %1581 = vmatpush1.msra.mxu0 0.0
        %1582 = vmatprep.subr.mxu0 0.0
        %1583 = vmatpush1.msra.mxu0 0.0
        %1584 = vmatprep.subr.mxu0 0.0
        %1585 = vmatpush1.msra.mxu0 0.0
        %1586 = vmatprep.subr.mxu0 0.0
        %1587 = vmatpush1.msra.mxu0 0.0
        %1588 = vmatprep.subr.mxu0 0.0
        %1589 = vmatpush1.msra.mxu0 0.0
        %1590 = vmatprep.subr.mxu0 0.0
        %1591 = vmatpush1.msra.mxu0 0.0
        %1592 = vmatprep.subr.mxu0 0.0
        %1593 = vmatpush1.msra.mxu0 0.0
        %1594 = vmatprep.subr.mxu0 0.0
        %1595 = vmatpush1.msra.mxu0 0.0
        %1596 = vmatprep.subr.mxu0 0.0
        %1597 = vmatpush1.msra.mxu0 0.0
        %1598 = vmatprep.subr.mxu0 0.0
        %1599 = vmatpush1.msra.mxu0 0.0
        %1600 = vmatprep.subr.mxu0 0.0
        %1601 = vmatpush1.msra.mxu0 0.0
        %1602 = vmatprep.subr.mxu0 0.0
        %1603 = vmatpush1.msra.mxu0 0.0
        %1604 = vmatprep.subr.mxu0 0.0
        %1605 = vmatpush1.msra.mxu0 0.0
        %1606 = vmatprep.mubr.f32.mxu0 0.0
        %1607 = vmatmul.mubr.f32.gmra.mrb[0].mxu0 %v1540
        %v1608 = vpop.f32.mrb[0].mxu0
        %v1609 = vadd.f32 0.0, %v1608
        %v1610 = vpop.f32.mrb[0].mxu0
        %1611 = vdwg.mxu0
        %v1612 = vadd.f32 %v1528, %v1609
        %1613 = vst [vmem:[#allocation2] sm:$0xf] %v1612
        %p1614 = scmp.eq.s32.totalorder %s22, 14
        // Predicated region
        $region37: #{model_forward.1} parent=31 // pred_check
          %p1615 = pneg %p1614
        $region38: #{model_forward.1} parent=31 // pred_check_branch
          %1617 = sbr.rel (%p1615) target = $region40
        $region39: #{model_forward.1} parent=31 // pred_region
          %v1618 = vld [vmem:[#allocation2] sm:$0xf]
          %v1619 = vld [vmem:[%s217] sm:$0xf]
          %v1620 = vadd.f32 %v1618, %v1619
          %v1621 = vmax.f32 %v1620, 0.0
          %1622 = vst [vmem:[%s203] sm:$0xf] %v1621
        $region40: #{model_forward.1} parent=31 // pred_fallthru
          _
        %s1623 = sand.u32 %s115, 1
        %s1624 = scalar_lea.sflag [#allocation4], %s1623
        %s1625 = sand.u32 %s115, 1
        %s1626 = smul.addr %s1625, 4
        %s1627 = scalar_lea.vmem [#allocation3], %s1626
        // Predicated region
        $region41: #{model_forward.1} parent=31 // pred_check
          %p1628 = pneg %p125
        $region42: #{model_forward.1} parent=31 // pred_check_branch
          %1630 = sbr.rel (%p1628) target = $region44
        $region43: #{model_forward.1} parent=31 // pred_region
          %s1632 = ssub.s32 64, 64
          %1633 = vsyncadd %s1624, %s1632
          %s1634 = smul.addr %s21, 64
          %s1635 = scalar_lea.hbm %s3, %s1634
          %s1637 = sshll.u32 %s1627, 4
          %s1638 = int_to_ptr.vmem [resolvable:$true] %s1637
          %1640 = dma.vmem_to_hbm [thread:$0]  %s1638, 64, %s1635, %s1624
        $region44: #{model_forward.1} parent=31 // pred_fallthru
          _
      $region32: #{model_forward.1} parent=5 // pred_fallthru
        _
      %p1641 = scmp.le.s32.totalorder 2, %s12
      // Predicated region
      $region45: #{model_forward.1} parent=5 // pred_check
        %p1642 = pneg %p1641
      $region46: #{model_forward.1} parent=5 // pred_check_branch
        %1644 = sbr.rel (%p1642) target = $region48
      $region47: #{model_forward.1} parent=5 // pred_region
        %s1645 = ssub.s32 %s12, 2
        // Predicated region
        $region49: #{model_forward.1} parent=47 // pred_check
          %p1646 = pneg %p131
        $region50: #{model_forward.1} parent=47 // pred_check_branch
          %1648 = sbr.rel (%p1646) target = $region52
        $region51: #{model_forward.1} parent=47 // pred_region
          %s1649 = sand.u32 %s116, 1
          %s1650 = scalar_lea.sflag [#allocation4], %s1649
          %s1651 = sand.u32 %s116, 1
          %s1652 = smul.addr %s1651, 4
          %s1653 = scalar_lea.vmem [#allocation3], %s1652
          %1654 = dma.done %s1650, 64
        $region52: #{model_forward.1} parent=47 // pred_fallthru
          _
      $region48: #{model_forward.1} parent=5 // pred_fallthru
        _
    $region6: #{model_forward.1} parent=1 // loop_footer
      %s16 = sadd.s32 1, %s12
    $region7: #{model_forward.1} parent=1 // loop_footer_branch
      %11 = sbr.rel target = $region3
    $region8: #{model_forward.1} parent=1 // loop_exit
      _
    %1655 = vsyncpa [#allocation4], 1
    %s1656 = scalar_lea.sflag [#allocation4], 1
    %1657 = vsyncpa %s1656, 1

</llo_original>
